<compile_context>
chip_gen: v7x
topology: tpu7x:2x2x1
jax: 0.10.0
libtpu: 0.0.40
codegen_flags: <defaults>
</compile_context>

<pallas_src>
import jax
import jax.numpy as jnp
from jax.experimental import pallas as pl
from jax.experimental.pallas import tpu as pltpu

HIDDEN1 = 256
HIDDEN2 = 512
LANE = 128


def _round_up(x, m):
    return (x + m - 1) // m * m


def _behavioural_kernel(x_ref, wa_ref, ba_ref, w1_ref, b1_ref,
                        w2_ref, b2_ref, w3_ref, b3_ref, out_ref):
    # Fused input+command layer: single augmented matmul (bf16 operands, f32 acc).
    t = jnp.dot(x_ref[...], wa_ref[...],
                preferred_element_type=jnp.float32) + ba_ref[...]
    # bf16 tanh: bf16 EUP path on v6e/v7x (~2x transcendental throughput) and half
    # the vregs for t; on v5e Mosaic computes it via f32 internally. The bf16 result
    # is exactly what the next matmul consumes.
    t16 = jnp.tanh(t.astype(jnp.bfloat16))

    h1 = jnp.dot(t16, w1_ref[...],
                 preferred_element_type=jnp.float32) + b1_ref[...]
    h1 = jnp.maximum(h1, 0.0)

    h2 = jnp.dot(h1.astype(jnp.bfloat16), w2_ref[...],
                 preferred_element_type=jnp.float32) + b2_ref[...]
    h2 = jnp.maximum(h2, 0.0)

    logits = jnp.dot(h2.astype(jnp.bfloat16), w3_ref[...],
                     preferred_element_type=jnp.float32) + b3_ref[...]

    # Numerically stable softmax over the lane-padded action dimension (f32).
    # Padded columns carry a -1e30 bias, so exp() underflows to exactly 0 there
    # and the denominator matches the unpadded softmax.
    m = jnp.max(logits, axis=-1, keepdims=True)
    e = jnp.exp(logits - m)
    denom = jnp.sum(e, axis=-1, keepdims=True)
    # Exact reciprocal: denom is only (tb, 1), so the approx EUP path saves nothing
    # and exact division makes rows sum to 1 to f32 precision.
    out_ref[...] = e * (1.0 / denom)


def prepare_params(params):
    """One-time parameter preparation (hoisted out of the per-call hot path):
    fuse the command linear into the input linear, cast weights to bf16, and
    lane-pad the final layer with a -1e30 bias in the padded columns."""
    action_shape = params["w3"].shape[1]
    act_pad = _round_up(max(action_shape, LANE), LANE)

    w_aug = jnp.concatenate([params["w_in"], params["wc"]], axis=0).astype(jnp.bfloat16)
    b_aug = (params["b_in"] + params["bc"]).astype(jnp.float32)

    w1 = params["w1"].astype(jnp.bfloat16)
    b1 = params["b1"].astype(jnp.float32)
    w2 = params["w2"].astype(jnp.bfloat16)
    b2 = params["b2"].astype(jnp.float32)

    w3p = jnp.zeros((HIDDEN2, act_pad), jnp.bfloat16)
    w3p = w3p.at[:, :action_shape].set(params["w3"].astype(jnp.bfloat16))
    b3p = jnp.full((1, act_pad), -1e30, jnp.float32)
    b3p = b3p.at[:, :action_shape].set(params["b3"].astype(jnp.float32))

    return dict(w_aug=w_aug, b_aug=b_aug, w1=w1, b1=b1, w2=w2, b2=b2,
                w3=w3p, b3=b3p, action_shape=action_shape, act_pad=act_pad)


def behavioural_function(state, horizon, reward, prepared, *, block_batch=1024):
    """Hot path: concat+cast the inputs, pick an adaptive batch tile, run the kernel."""
    B = state.shape[0]
    action_shape = prepared["action_shape"]
    act_pad = prepared["act_pad"]
    d_aug = prepared["w_aug"].shape[0]

    # NOTE: horizon/reward are cast to bf16 along with the state; for very large
    # horizon magnitudes keep them pre-scaled if full f32 conditioning is required.
    x_aug = jnp.concatenate([state, horizon, reward], axis=1).astype(jnp.bfloat16)

    # Adaptive batch tile: balance the tile across the number of blocks so batch
    # padding is bounded by <=15 rows per block, cap at block_batch (default 1024).
    # When B >= 512 force >=2 grid steps so a dual-TC chip (v7x) can shard the
    # "parallel" batch axis across cores.
    n_blocks = max(1, pl.cdiv(B, block_batch))
    if B >= 512:
        n_blocks = max(n_blocks, 2)
    tb = _round_up(pl.cdiv(B, n_blocks), 16)      # multiple of 16 (bf16 sublanes)
    grid_b = pl.cdiv(B, tb)
    b_pad = grid_b * tb
    if b_pad != B:
        x_aug = jnp.pad(x_aug, ((0, b_pad - B), (0, 0)))

    grid = (grid_b,)

    flops = 2 * b_pad * (d_aug * HIDDEN1 + HIDDEN1 * HIDDEN2
                         + HIDDEN2 * HIDDEN2 + HIDDEN2 * act_pad)
    weight_bytes = 2 * (d_aug * HIDDEN1 + HIDDEN1 * HIDDEN2
                        + HIDDEN2 * HIDDEN2 + HIDDEN2 * act_pad)
    bytes_accessed = weight_bytes + 2 * b_pad * d_aug + 4 * b_pad * act_pad

    out = pl.pallas_call(
        _behavioural_kernel,
        out_shape=jax.ShapeDtypeStruct((b_pad, act_pad), jnp.float32),
        grid=grid,
        in_specs=[
            pl.BlockSpec((tb, d_aug), lambda i: (i, 0)),        # x_aug (streamed)
            # Constant index maps: weights/biases are DMA'd once and stay resident.
            pl.BlockSpec((d_aug, HIDDEN1), lambda i: (0, 0)),
            pl.BlockSpec((1, HIDDEN1), lambda i: (0, 0)),
            pl.BlockSpec((HIDDEN1, HIDDEN2), lambda i: (0, 0)),
            pl.BlockSpec((1, HIDDEN2), lambda i: (0, 0)),
            pl.BlockSpec((HIDDEN2, HIDDEN2), lambda i: (0, 0)),
            pl.BlockSpec((1, HIDDEN2), lambda i: (0, 0)),
            pl.BlockSpec((HIDDEN2, act_pad), lambda i: (0, 0)),
            pl.BlockSpec((1, act_pad), lambda i: (0, 0)),
        ],
        out_specs=pl.BlockSpec((tb, act_pad), lambda i: (i, 0)),
        compiler_params=pltpu.CompilerParams(
            dimension_semantics=("parallel",),
            # ~13 MB live VMEM at TB=1024; raise the scoped limit explicitly so the
            # large tile is safe on v5e (16 MiB default) and still fits v7x (64 MiB).
            vmem_limit_bytes=32 * 1024 * 1024),
        cost_estimate=pl.CostEstimate(
            flops=flops,
            transcendentals=b_pad * (HIDDEN1 + act_pad),
            bytes_accessed=bytes_accessed),
    )(x_aug, prepared["w_aug"], prepared["b_aug"],
      prepared["w1"], prepared["b1"], prepared["w2"], prepared["b2"],
      prepared["w3"], prepared["b3"])

    return out[:B, :action_shape]


def init_params(key, input_shape, action_shape, command_shape=2):
    """Deterministic synthetic parameter init (PyTorch-equivalent shapes,
    stored transposed as (in, out))."""
    ks = jax.random.split(key, 5)

    def lin(k, fan_in, fan_out):
        bound = 1.0 / jnp.sqrt(fan_in)
        w = jax.random.uniform(k, (fan_in, fan_out), jnp.float32, -bound, bound)
        b = jnp.zeros((1, fan_out), jnp.float32)
        return w, b

    w_in, b_in = lin(ks[0], input_shape, HIDDEN1)
    wc, bc = lin(ks[1], command_shape, HIDDEN1)
    w1, b1 = lin(ks[2], HIDDEN1, HIDDEN2)
    w2, b2 = lin(ks[3], HIDDEN2, HIDDEN2)
    w3, b3 = lin(ks[4], HIDDEN2, action_shape)
    return dict(w_in=w_in, b_in=b_in, wc=wc, bc=bc,
                w1=w1, b1=b1, w2=w2, b2=b2, w3=w3, b3=b3)


def reference(state, horizon, reward, p):
    """Pure-JAX f32 reference for correctness checking."""
    inputs = state @ p["w_in"] + p["b_in"]
    catted = jnp.concatenate([horizon, reward], axis=1)
    command = catted @ p["wc"] + p["bc"]
    t = jnp.tanh(inputs + command)
    h1 = jax.nn.relu(t @ p["w1"] + p["b1"])
    h2 = jax.nn.relu(h1 @ p["w2"] + p["b2"])
    logits = h2 @ p["w3"] + p["b3"]
    return jax.nn.softmax(logits, axis=-1)


if __name__ == "__main__":
    key = jax.random.PRNGKey(0)
    k_param, k_state, k_h, k_r = jax.random.split(key, 4)

    batch = 8
    input_shape = 32
    action_shape = 4

    params = init_params(k_param, input_shape, action_shape)
    prepared = prepare_params(params)          # one-time, out of the hot path
    prepared = jax.tree_util.tree_map(
        lambda x: jax.block_until_ready(x) if hasattr(x, "block_until_ready") else x,
        prepared)

    state = jax.random.normal(k_state, (batch, input_shape), jnp.float32)
    horizon = jax.random.uniform(k_h, (batch, 1), jnp.float32, 0.0, 10.0)
    reward = jax.random.uniform(k_r, (batch, 1), jnp.float32, -1.0, 1.0)

    out = behavioural_function(state, horizon, reward, prepared)
    out = jax.block_until_ready(out)

    ref = reference(state, horizon, reward, params)
    assert out.shape == (batch, action_shape)
    # bf16 matmuls + bf16 tanh => compare with a bf16-appropriate tolerance.
    assert jnp.allclose(out, ref, atol=2e-2, rtol=2e-2), "mismatch vs reference"
    assert jnp.allclose(jnp.sum(out, axis=-1), 1.0, atol=1e-3), \
        "softmax rows must sum to ~1"

    print("KERNEL_OK")
</pallas_src>

<mosaic_0001>
module attributes {stable_mosaic.version = 11 : i64} {
  func.func @_behavioural_kernel(%arg0: i32, %arg1: memref<16x34xbf16, #tpu.memory_space<vmem>>, %arg2: memref<34x256xbf16, #tpu.memory_space<vmem>>, %arg3: memref<1x256xf32, #tpu.memory_space<vmem>>, %arg4: memref<256x512xbf16, #tpu.memory_space<vmem>>, %arg5: memref<1x512xf32, #tpu.memory_space<vmem>>, %arg6: memref<512x512xbf16, #tpu.memory_space<vmem>>, %arg7: memref<1x512xf32, #tpu.memory_space<vmem>>, %arg8: memref<512x128xbf16, #tpu.memory_space<vmem>>, %arg9: memref<1x128xf32, #tpu.memory_space<vmem>>, %arg10: memref<16x128xf32, #tpu.memory_space<vmem>>) attributes {dimension_semantics = [#tpu.dimension_semantics<parallel>], iteration_bounds = array<i64: 1>, scalar_prefetch = 0 : i64, scratch_operands = 0 : i64, tpu.core_type = #tpu.core_type<tc>, window_params = [{transform_indices = @transform_0, window_bounds = array<i64: 16, 34>}, {pipeline_mode = #tpu.pipeline_mode<synchronous>, transform_indices = @transform_1, window_bounds = array<i64: 34, 256>}, {pipeline_mode = #tpu.pipeline_mode<synchronous>, transform_indices = @transform_2, window_bounds = array<i64: 1, 256>}, {pipeline_mode = #tpu.pipeline_mode<synchronous>, transform_indices = @transform_3, window_bounds = array<i64: 256, 512>}, {pipeline_mode = #tpu.pipeline_mode<synchronous>, transform_indices = @transform_4, window_bounds = array<i64: 1, 512>}, {pipeline_mode = #tpu.pipeline_mode<synchronous>, transform_indices = @transform_5, window_bounds = array<i64: 512, 512>}, {pipeline_mode = #tpu.pipeline_mode<synchronous>, transform_indices = @transform_6, window_bounds = array<i64: 1, 512>}, {pipeline_mode = #tpu.pipeline_mode<synchronous>, transform_indices = @transform_7, window_bounds = array<i64: 512, 128>}, {pipeline_mode = #tpu.pipeline_mode<synchronous>, transform_indices = @transform_8, window_bounds = array<i64: 1, 128>}, {transform_indices = @transform_9, window_bounds = array<i64: 16, 128>}]} {
    %c0 = arith.constant 0 : index
    %c0_0 = arith.constant 0 : index
    %0 = vector.load %arg1[%c0, %c0_0] : memref<16x34xbf16, #tpu.memory_space<vmem>>, vector<16x34xbf16>
    %c0_1 = arith.constant 0 : index
    %c0_2 = arith.constant 0 : index
    %1 = vector.load %arg2[%c0_1, %c0_2] : memref<34x256xbf16, #tpu.memory_space<vmem>>, vector<34x256xbf16>
    %cst = arith.constant dense<0.000000e+00> : vector<16x256xf32>
    %2 = tpu.matmul %0, %1, %cst {dimension_numbers = #tpu.dot_dimension_numbers<[1], [0], [0], [1], [0, 0, 1, 1], [], []>} : vector<16x34xbf16>, vector<34x256xbf16>, vector<16x256xf32> -> vector<16x256xf32>
    %c0_3 = arith.constant 0 : index
    %c0_4 = arith.constant 0 : index
    %3 = vector.load %arg3[%c0_3, %c0_4] : memref<1x256xf32, #tpu.memory_space<vmem>>, vector<1x256xf32>
    %4 = vector.broadcast %3 : vector<1x256xf32> to vector<16x256xf32>
    %5 = arith.addf %2, %4 : vector<16x256xf32>
    %6 = arith.truncf %5 : vector<16x256xf32> to vector<16x256xbf16>
    %7 = math.tanh %6 : vector<16x256xbf16>
    %c0_5 = arith.constant 0 : index
    %c0_6 = arith.constant 0 : index
    %8 = vector.load %arg4[%c0_5, %c0_6] : memref<256x512xbf16, #tpu.memory_space<vmem>>, vector<256x512xbf16>
    %cst_7 = arith.constant dense<0.000000e+00> : vector<16x512xf32>
    %9 = tpu.matmul %7, %8, %cst_7 {dimension_numbers = #tpu.dot_dimension_numbers<[1], [0], [0], [1], [0, 0, 1, 1], [], []>} : vector<16x256xbf16>, vector<256x512xbf16>, vector<16x512xf32> -> vector<16x512xf32>
    %c0_8 = arith.constant 0 : index
    %c0_9 = arith.constant 0 : index
    %10 = vector.load %arg5[%c0_8, %c0_9] : memref<1x512xf32, #tpu.memory_space<vmem>>, vector<1x512xf32>
    %11 = vector.broadcast %10 : vector<1x512xf32> to vector<16x512xf32>
    %12 = arith.addf %9, %11 : vector<16x512xf32>
    %cst_10 = arith.constant 0.000000e+00 : f32
    %13 = vector.broadcast %cst_10 : f32 to vector<16x512xf32>
    %14 = arith.maximumf %12, %13 : vector<16x512xf32>
    %15 = arith.truncf %14 : vector<16x512xf32> to vector<16x512xbf16>
    %c0_11 = arith.constant 0 : index
    %c0_12 = arith.constant 0 : index
    %16 = vector.load %arg6[%c0_11, %c0_12] : memref<512x512xbf16, #tpu.memory_space<vmem>>, vector<512x512xbf16>
    %cst_13 = arith.constant dense<0.000000e+00> : vector<16x512xf32>
    %17 = tpu.matmul %15, %16, %cst_13 {dimension_numbers = #tpu.dot_dimension_numbers<[1], [0], [0], [1], [0, 0, 1, 1], [], []>} : vector<16x512xbf16>, vector<512x512xbf16>, vector<16x512xf32> -> vector<16x512xf32>
    %c0_14 = arith.constant 0 : index
    %c0_15 = arith.constant 0 : index
    %18 = vector.load %arg7[%c0_14, %c0_15] : memref<1x512xf32, #tpu.memory_space<vmem>>, vector<1x512xf32>
    %19 = vector.broadcast %18 : vector<1x512xf32> to vector<16x512xf32>
    %20 = arith.addf %17, %19 : vector<16x512xf32>
    %cst_16 = arith.constant 0.000000e+00 : f32
    %21 = vector.broadcast %cst_16 : f32 to vector<16x512xf32>
    %22 = arith.maximumf %20, %21 : vector<16x512xf32>
    %23 = arith.truncf %22 : vector<16x512xf32> to vector<16x512xbf16>
    %c0_17 = arith.constant 0 : index
    %c0_18 = arith.constant 0 : index
    %24 = vector.load %arg8[%c0_17, %c0_18] : memref<512x128xbf16, #tpu.memory_space<vmem>>, vector<512x128xbf16>
    %cst_19 = arith.constant dense<0.000000e+00> : vector<16x128xf32>
    %25 = tpu.matmul %23, %24, %cst_19 {dimension_numbers = #tpu.dot_dimension_numbers<[1], [0], [0], [1], [0, 0, 1, 1], [], []>} : vector<16x512xbf16>, vector<512x128xbf16>, vector<16x128xf32> -> vector<16x128xf32>
    %c0_20 = arith.constant 0 : index
    %c0_21 = arith.constant 0 : index
    %26 = vector.load %arg9[%c0_20, %c0_21] : memref<1x128xf32, #tpu.memory_space<vmem>>, vector<1x128xf32>
    %27 = vector.broadcast %26 : vector<1x128xf32> to vector<16x128xf32>
    %28 = arith.addf %25, %27 : vector<16x128xf32>
    %cst_22 = arith.constant dense<0xFF800000> : vector<16xf32>
    %29 = vector.multi_reduction <maximumf>, %28, %cst_22 [1] : vector<16x128xf32> to vector<16xf32>
    %30 = vector.shape_cast %29 : vector<16xf32> to vector<16x1xf32>
    %31 = vector.broadcast %30 : vector<16x1xf32> to vector<16x128xf32>
    %32 = arith.subf %28, %31 : vector<16x128xf32>
    %33 = math.exp %32 : vector<16x128xf32>
    %cst_23 = arith.constant dense<0.000000e+00> : vector<16xf32>
    %34 = vector.multi_reduction <add>, %33, %cst_23 [1] : vector<16x128xf32> to vector<16xf32>
    %35 = vector.shape_cast %34 : vector<16xf32> to vector<16x1xf32>
    %cst_24 = arith.constant 1.000000e+00 : f32
    %36 = vector.broadcast %cst_24 : f32 to vector<16x1xf32>
    %37 = arith.divf %36, %35 : vector<16x1xf32>
    %38 = vector.broadcast %37 : vector<16x1xf32> to vector<16x128xf32>
    %39 = arith.mulf %33, %38 : vector<16x128xf32>
    %c0_25 = arith.constant 0 : index
    %c0_26 = arith.constant 0 : index
    %40 = vector.load %arg10[%c0_25, %c0_26] : memref<16x128xf32, #tpu.memory_space<vmem>>, vector<16x128xf32>
    tpu.vector_store %arg10[%c0_25, %c0_26], %39 {strides = array<i32>} : memref<16x128xf32, #tpu.memory_space<vmem>>, vector<16x128xf32>,
    return
  }
  func.func @transform_0(%arg0: i32) -> (i32, i32) {
    %c0_i32 = arith.constant 0 : i32
    %c0_i32_0 = arith.constant 0 : i32
    return %arg0, %c0_i32 : i32, i32
  }
  func.func @transform_1(%arg0: i32) -> (i32, i32) {
    %c0_i32 = arith.constant 0 : i32
    %c0_i32_0 = arith.constant 0 : i32
    %c0_i32_1 = arith.constant 0 : i32
    return %c0_i32, %c0_i32_0 : i32, i32
  }
  func.func @transform_2(%arg0: i32) -> (i32, i32) {
    %c0_i32 = arith.constant 0 : i32
    %c0_i32_0 = arith.constant 0 : i32
    %c0_i32_1 = arith.constant 0 : i32
    return %c0_i32, %c0_i32_0 : i32, i32
  }
  func.func @transform_3(%arg0: i32) -> (i32, i32) {
    %c0_i32 = arith.constant 0 : i32
    %c0_i32_0 = arith.constant 0 : i32
    %c0_i32_1 = arith.constant 0 : i32
    return %c0_i32, %c0_i32_0 : i32, i32
  }
  func.func @transform_4(%arg0: i32) -> (i32, i32) {
    %c0_i32 = arith.constant 0 : i32
    %c0_i32_0 = arith.constant 0 : i32
    %c0_i32_1 = arith.constant 0 : i32
    return %c0_i32, %c0_i32_0 : i32, i32
  }
  func.func @transform_5(%arg0: i32) -> (i32, i32) {
    %c0_i32 = arith.constant 0 : i32
    %c0_i32_0 = arith.constant 0 : i32
    %c0_i32_1 = arith.constant 0 : i32
    return %c0_i32, %c0_i32_0 : i32, i32
  }
  func.func @transform_6(%arg0: i32) -> (i32, i32) {
    %c0_i32 = arith.constant 0 : i32
    %c0_i32_0 = arith.constant 0 : i32
    %c0_i32_1 = arith.constant 0 : i32
    return %c0_i32, %c0_i32_0 : i32, i32
  }
  func.func @transform_7(%arg0: i32) -> (i32, i32) {
    %c0_i32 = arith.constant 0 : i32
    %c0_i32_0 = arith.constant 0 : i32
    %c0_i32_1 = arith.constant 0 : i32
    return %c0_i32, %c0_i32_0 : i32, i32
  }
  func.func @transform_8(%arg0: i32) -> (i32, i32) {
    %c0_i32 = arith.constant 0 : i32
    %c0_i32_0 = arith.constant 0 : i32
    %c0_i32_1 = arith.constant 0 : i32
    return %c0_i32, %c0_i32_0 : i32, i32
  }
  func.func @transform_9(%arg0: i32) -> (i32, i32) {
    %c0_i32 = arith.constant 0 : i32
    %c0_i32_0 = arith.constant 0 : i32
    return %arg0, %c0_i32 : i32, i32
  }
}

</mosaic_0001>

<llo_original>
// kernel: tpu_custom_call.1
$region0: #{tpu_custom_call.1}
  #allocation0 [shape = 'u32[]', space=smem, size = 0x4, offset = 0x4, fixed_abs, tag = 'smem constant byte address 0x4 - core index']
  #allocation1 [shape = 'u32[144,128]{1,0:T(1,128)}', space=vmem, size = 0x12000, scoped, tag = 'internal scratch']
  %s0 = inlined_call_operand.hbm [shape: bf16[16,34], index: 0, kind: input, shape index: {}]
  %s1 = inlined_call_operand.hbm [shape: bf16[34,256], index: 1, kind: input, shape index: {}]
  %s2 = inlined_call_operand.vmem [shape: f32[1,256], index: 2, kind: input, shape index: {}]
  %s3 = inlined_call_operand.hbm [shape: bf16[256,512], index: 3, kind: input, shape index: {}]
  %s4 = inlined_call_operand.vmem [shape: f32[1,512], index: 4, kind: input, shape index: {}]
  %s5 = inlined_call_operand.hbm [shape: bf16[512,512], index: 5, kind: input, shape index: {}]
  %s6 = inlined_call_operand.vmem [shape: f32[1,512], index: 6, kind: input, shape index: {}]
  %s7 = inlined_call_operand.hbm [shape: bf16[512,128], index: 7, kind: input, shape index: {}]
  %s8 = inlined_call_operand.vmem [shape: f32[1,128], index: 8, kind: input, shape index: {}]
  %s9 = inlined_call_operand.hbm [shape: f32[16,128], index: 9, kind: output, shape index: {}]
  %s10 = sld [smem:[#allocation0]]
  $region66: #{tpu_custom_call.1} parent=0
    _
  %s12 = ssub.s32 1, %s10
  %s13 = scalar_select 0, %s12, %s10
  $region1: #{tpu_custom_call.1} parent=0
    #allocation2 [shape = 'u8[4096]{0}', space=vmem, size = 0x1000, scoped, tag = 'input window, operand 0, single buffered']
    #allocation3 [shape = 's32[1]{0}', space=sflag, size = 0x4, scoped, tag = 'scoped memory for tpu_custom_call.1']
    #allocation4 [shape = 's32[1]{0}', space=sflag, size = 0x4, scoped, tag = 'scoped memory for tpu_custom_call.1']
    #allocation5 [shape = 'u8[20480]{0}', space=vmem, size = 0x5000, scoped, tag = 'input window, operand 1, single buffered']
    #allocation6 [shape = 's32[1]{0}', space=sflag, size = 0x4, scoped, tag = 'scoped memory for tpu_custom_call.1']
    #allocation7 [shape = 'u8[262144]{0}', space=vmem, size = 0x40000, scoped, tag = 'input window, operand 3, single buffered']
    #allocation8 [shape = 'u8[524288]{0}', space=vmem, size = 0x80000, scoped, tag = 'input window, operand 5, single buffered']
    #allocation9 [shape = 's32[1]{0}', space=sflag, size = 0x4, scoped, tag = 'scoped memory for tpu_custom_call.1']
    #allocation10 [shape = 'u8[131072]{0}', space=vmem, size = 0x20000, scoped, tag = 'input window, operand 7, single buffered']
    #allocation11 [shape = 'u8[8192]{0}', space=vmem, size = 0x2000, scoped, tag = 'output window, operand 0, single buffered']
    %14 = vsyncpa [#allocation3], 0
    %15 = vsyncpa [#allocation6], 0
    %16 = vsyncpa [#allocation9], 0
    %17 = vsyncpa [#allocation4], 0
    // Predicated region
    $region2: #{tpu_custom_call.1} parent=1 // pred_check
      _
    $region3: #{tpu_custom_call.1} parent=1 // pred_check_branch
      %19 = sbr.rel (0) target = $region5
    $region4: #{tpu_custom_call.1} parent=1 // pred_region
      %s21 = ssub.s32 128, 128
      %22 = vsyncadd [#allocation3], %s21
      %s23 = sshll.u32 [#allocation2], 4
      %s24 = int_to_ptr.vmem [resolvable:$true] %s23
      %29 = dma.hbm_to_vmem [thread:$0]  %s0, 128, %s24, [#allocation3], 64, 64, 4
    $region5: #{tpu_custom_call.1} parent=1 // pred_fallthru
      _
    // Predicated region
    $region6: #{tpu_custom_call.1} parent=1 // pred_check
      _
    $region7: #{tpu_custom_call.1} parent=1 // pred_check_branch
      %31 = sbr.rel (0) target = $region9
    $region8: #{tpu_custom_call.1} parent=1 // pred_region
      %s33 = ssub.s32 640, 640
      %34 = vsyncadd [#allocation6], %s33
      %s35 = sshll.u32 [#allocation5], 4
      %s36 = int_to_ptr.vmem [resolvable:$true] %s35
      %41 = dma.hbm_to_vmem [thread:$0]  %s1, 640, %s36, [#allocation6], 128, 128, 8
    $region9: #{tpu_custom_call.1} parent=1 // pred_fallthru
      _
    // Predicated region
    $region10: #{tpu_custom_call.1} parent=1 // pred_check
      _
    $region11: #{tpu_custom_call.1} parent=1 // pred_check_branch
      %43 = sbr.rel (0) target = $region13
    $region12: #{tpu_custom_call.1} parent=1 // pred_region
      _
    $region13: #{tpu_custom_call.1} parent=1 // pred_fallthru
      _
    // Predicated region
    $region14: #{tpu_custom_call.1} parent=1 // pred_check
      _
    $region15: #{tpu_custom_call.1} parent=1 // pred_check_branch
      %45 = sbr.rel (0) target = $region17
    $region16: #{tpu_custom_call.1} parent=1 // pred_region
      %s47 = ssub.s32 8192, 8192
      %48 = vsyncadd [#allocation6], %s47
      %s49 = sshll.u32 [#allocation7], 4
      %s50 = int_to_ptr.vmem [resolvable:$true] %s49
      %55 = dma.hbm_to_vmem [thread:$0]  %s3, 8192, %s50, [#allocation6], 256, 256, 16
    $region17: #{tpu_custom_call.1} parent=1 // pred_fallthru
      _
    // Predicated region
    $region18: #{tpu_custom_call.1} parent=1 // pred_check
      _
    $region19: #{tpu_custom_call.1} parent=1 // pred_check_branch
      %57 = sbr.rel (0) target = $region21
    $region20: #{tpu_custom_call.1} parent=1 // pred_region
      _
    $region21: #{tpu_custom_call.1} parent=1 // pred_fallthru
      _
    // Predicated region
    $region22: #{tpu_custom_call.1} parent=1 // pred_check
      _
    $region23: #{tpu_custom_call.1} parent=1 // pred_check_branch
      %59 = sbr.rel (0) target = $region25
    $region24: #{tpu_custom_call.1} parent=1 // pred_region
      %s61 = ssub.s32 16384, 16384
      %62 = vsyncadd [#allocation9], %s61
      %s63 = sshll.u32 [#allocation8], 4
      %s64 = int_to_ptr.vmem [resolvable:$true] %s63
      %69 = dma.hbm_to_vmem [thread:$0]  %s5, 16384, %s64, [#allocation9], 256, 256, 16
    $region25: #{tpu_custom_call.1} parent=1 // pred_fallthru
      _
    // Predicated region
    $region26: #{tpu_custom_call.1} parent=1 // pred_check
      _
    $region27: #{tpu_custom_call.1} parent=1 // pred_check_branch
      %71 = sbr.rel (0) target = $region29
    $region28: #{tpu_custom_call.1} parent=1 // pred_region
      _
    $region29: #{tpu_custom_call.1} parent=1 // pred_fallthru
      _
    // Predicated region
    $region30: #{tpu_custom_call.1} parent=1 // pred_check
      _
    $region31: #{tpu_custom_call.1} parent=1 // pred_check_branch
      %73 = sbr.rel (0) target = $region33
    $region32: #{tpu_custom_call.1} parent=1 // pred_region
      %s75 = ssub.s32 4096, 4096
      %76 = vsyncadd [#allocation9], %s75
      %s77 = sshll.u32 [#allocation10], 4
      %s78 = int_to_ptr.vmem [resolvable:$true] %s77
      %83 = dma.hbm_to_vmem [thread:$0]  %s7, 4096, %s78, [#allocation9], 64, 64, 4
    $region33: #{tpu_custom_call.1} parent=1 // pred_fallthru
      _
    // Predicated region
    $region34: #{tpu_custom_call.1} parent=1 // pred_check
      _
    $region35: #{tpu_custom_call.1} parent=1 // pred_check_branch
      %85 = sbr.rel (0) target = $region37
    $region36: #{tpu_custom_call.1} parent=1 // pred_region
      _
    $region37: #{tpu_custom_call.1} parent=1 // pred_fallthru
      _
    // Predicated region
    $region38: #{tpu_custom_call.1} parent=1 // pred_check
      _
    $region39: #{tpu_custom_call.1} parent=1 // pred_check_branch
      %87 = sbr.rel (0) target = $region41
    $region40: #{tpu_custom_call.1} parent=1 // pred_region
      %88 = dma.done [#allocation3], 128
    $region41: #{tpu_custom_call.1} parent=1 // pred_fallthru
      _
    // Predicated region
    $region42: #{tpu_custom_call.1} parent=1 // pred_check
      _
    $region43: #{tpu_custom_call.1} parent=1 // pred_check_branch
      %90 = sbr.rel (0) target = $region45
    $region44: #{tpu_custom_call.1} parent=1 // pred_region
      %91 = dma.done [#allocation6], 640
    $region45: #{tpu_custom_call.1} parent=1 // pred_fallthru
      _
    // Predicated region
    $region46: #{tpu_custom_call.1} parent=1 // pred_check
      _
    $region47: #{tpu_custom_call.1} parent=1 // pred_check_branch
      %93 = sbr.rel (0) target = $region49
    $region48: #{tpu_custom_call.1} parent=1 // pred_region
      %94 = dma.done [#allocation6], 8192
    $region49: #{tpu_custom_call.1} parent=1 // pred_fallthru
      _
    // Predicated region
    $region50: #{tpu_custom_call.1} parent=1 // pred_check
      _
    $region51: #{tpu_custom_call.1} parent=1 // pred_check_branch
      %96 = sbr.rel (0) target = $region53
    $region52: #{tpu_custom_call.1} parent=1 // pred_region
      %97 = dma.done [#allocation9], 16384
    $region53: #{tpu_custom_call.1} parent=1 // pred_fallthru
      _
    // Predicated region
    $region54: #{tpu_custom_call.1} parent=1 // pred_check
      _
    $region55: #{tpu_custom_call.1} parent=1 // pred_check_branch
      %99 = sbr.rel (0) target = $region57
    $region56: #{tpu_custom_call.1} parent=1 // pred_region
      %100 = dma.done [#allocation9], 4096
    $region57: #{tpu_custom_call.1} parent=1 // pred_fallthru
      _
    %v102 = vld [vmem:[#allocation2] sm:$0xf]
    %v103 = vld [vmem:[#allocation2 + $0x4] sm:$0xf]
    %v104 = vld [vmem:[#allocation5] sm:$0xff]
    %v105 = vld [vmem:[#allocation5 + $0x8] sm:$0xff]
    %v106 = vld [vmem:[#allocation5 + $0x10] sm:$0xff]
    %v107 = vld [vmem:[#allocation5 + $0x18] sm:$0xff]
    %v108 = vld [vmem:[#allocation5 + $0x20] sm:$0x11]
    %v109 = vld [vmem:[%s2] sm:$0x3]
    %v111 = vlaneseq
    %v112 = vshrl.u32 %v111, 7
    %v113 = vsub.s32 0, %v112
    %v114 = vrot.slane %v109, %v113
    %v115 = vlaneseq
    %v116 = vshrl.u32 %v115, 7
    %v117 = vsub.s32 1, %v116
    %v118 = vrot.slane %v109, %v117
    %v123 = vunpack.c.l.b16 %v102
    %v124 = vunpack.c.l.b16 %v103
    %v125 = vpack.c.b16 %v124, %v123
    %v131 = vunpack.c.l.b16 %v104
    %v132 = vunpack.c.h.b16 %v104
    %v133 = vunpack.c.l.b16 %v105
    %v134 = vunpack.c.h.b16 %v105
    %v135 = vunpack.c.l.b16 %v106
    %v136 = vunpack.c.h.b16 %v106
    %v137 = vunpack.c.l.b16 %v107
    %v138 = vunpack.c.h.b16 %v107
    %v139 = vunpack.c.l.b16 %v108
    %v140 = vunpack.c.h.b16 %v108
    %v141 = vpack.c.b16 %v133, %v131
    %v142 = vpack.c.b16 %v134, %v132
    %v143 = vpack.c.b16 %v137, %v135
    %v144 = vpack.c.b16 %v138, %v136
    %v145 = vpack.c.b16 %v139, %v139
    %v146 = vpack.c.b16 %v140, %v140
    %vm151 = vcmask 277504
    %v153 = vsel %vm151, %v125, 0
    %vm155 = vcmask 1040384
    %v157 = vsel %vm155, %v145, 0
    %v160 = vsel %vm155, %v146, 0
    %162 = vmatprep.subr.bf16.mxu0 %v142
    %163 = vmatpush1.bf16.msra.mxu0 %v141
    %164 = vmatprep.subr.bf16.mxu0 %v144
    %165 = vmatpush1.bf16.msra.mxu0 %v143
    %166 = vmatprep.subr.bf16.mxu0 %v160
    %167 = vmatpush1.bf16.msra.mxu0 %v157
    %168 = vmatprep.subr.bf16.mxu0 0
    %169 = vmatpush1.bf16.msra.mxu0 0
    %170 = vmatprep.subr.bf16.mxu0 0
    %171 = vmatpush1.bf16.msra.mxu0 0
    %172 = vmatprep.subr.bf16.mxu0 0
    %173 = vmatpush1.bf16.msra.mxu0 0
    %174 = vmatprep.subr.bf16.mxu0 0
    %175 = vmatpush1.bf16.msra.mxu0 0
    %176 = vmatprep.subr.bf16.mxu0 0
    %177 = vmatpush1.bf16.msra.mxu0 0
    %178 = vmatprep.subr.bf16.mxu0 0
    %179 = vmatpush1.bf16.msra.mxu0 0
    %180 = vmatprep.subr.bf16.mxu0 0
    %181 = vmatpush1.bf16.msra.mxu0 0
    %182 = vmatprep.subr.bf16.mxu0 0
    %183 = vmatpush1.bf16.msra.mxu0 0
    %184 = vmatprep.subr.bf16.mxu0 0
    %185 = vmatpush1.bf16.msra.mxu0 0
    %186 = vmatprep.subr.bf16.mxu0 0
    %187 = vmatpush1.bf16.msra.mxu0 0
    %188 = vmatprep.subr.bf16.mxu0 0
    %189 = vmatpush1.bf16.msra.mxu0 0
    %190 = vmatprep.subr.bf16.mxu0 0
    %191 = vmatpush1.bf16.msra.mxu0 0
    %192 = vmatprep.subr.bf16.mxu0 0
    %193 = vmatpush1.bf16.msra.mxu0 0
    %194 = vmatprep.mubr.bf16.mxu0 0
    %195 = vmatmul.mubr.bf16.gmra.mrb[0].mxu0 %v153
    %v196 = vpop.f32.mrb[0].mxu0
    %v197 = vadd.f32 %v114, %v196
    %v198 = vpop.f32.mrb[0].mxu0
    %v199 = vadd.f32 %v118, %v198
    %v200 = vpop.f32.mrb[0].mxu0
    %v201 = vadd.f32 %v114, %v200
    %v202 = vpop.f32.mrb[0].mxu0
    %v203 = vadd.f32 %v118, %v202
    %204 = vdwg.mxu0
    %v205 = vpack.c.bf16 %v201, %v197
    %v206 = vpack.c.bf16 %v203, %v199
    %v207 = vtanh.bf16.pop %v205
    %v208 = vtanh.bf16.pop %v206
    %v209 = vld [vmem:[#allocation7] sm:$0xff]
    %v210 = vld [vmem:[#allocation7 + $0x8] sm:$0xff]
    %v211 = vld [vmem:[#allocation7 + $0x10] sm:$0xff]
    %v212 = vld [vmem:[#allocation7 + $0x18] sm:$0xff]
    %v213 = vld [vmem:[#allocation7 + $0x20] sm:$0xff]
    %v214 = vld [vmem:[#allocation7 + $0x28] sm:$0xff]
    %v215 = vld [vmem:[#allocation7 + $0x30] sm:$0xff]
    %v216 = vld [vmem:[#allocation7 + $0x38] sm:$0xff]
    %v217 = vld [vmem:[#allocation7 + $0x40] sm:$0xff]
    %v218 = vld [vmem:[#allocation7 + $0x48] sm:$0xff]
    %v219 = vld [vmem:[#allocation7 + $0x50] sm:$0xff]
    %v220 = vld [vmem:[#allocation7 + $0x58] sm:$0xff]
    %v221 = vld [vmem:[#allocation7 + $0x60] sm:$0xff]
    %v222 = vld [vmem:[#allocation7 + $0x68] sm:$0xff]
    %v223 = vld [vmem:[#allocation7 + $0x70] sm:$0xff]
    %v224 = vld [vmem:[#allocation7 + $0x78] sm:$0xff]
    %v225 = vld [vmem:[#allocation7 + $0x80] sm:$0xff]
    %v226 = vld [vmem:[#allocation7 + $0x88] sm:$0xff]
    %v227 = vld [vmem:[#allocation7 + $0x90] sm:$0xff]
    %v228 = vld [vmem:[#allocation7 + $0x98] sm:$0xff]
    %v229 = vld [vmem:[#allocation7 + $0xa0] sm:$0xff]
    %v230 = vld [vmem:[#allocation7 + $0xa8] sm:$0xff]
    %v231 = vld [vmem:[#allocation7 + $0xb0] sm:$0xff]
    %v232 = vld [vmem:[#allocation7 + $0xb8] sm:$0xff]
    %v233 = vld [vmem:[#allocation7 + $0xc0] sm:$0xff]
    %v234 = vld [vmem:[#allocation7 + $0xc8] sm:$0xff]
    %v235 = vld [vmem:[#allocation7 + $0xd0] sm:$0xff]
    %v236 = vld [vmem:[#allocation7 + $0xd8] sm:$0xff]
    %v237 = vld [vmem:[#allocation7 + $0xe0] sm:$0xff]
    %v238 = vld [vmem:[#allocation7 + $0xe8] sm:$0xff]
    %v239 = vld [vmem:[#allocation7 + $0xf0] sm:$0xff]
    %v240 = vld [vmem:[#allocation7 + $0xf8] sm:$0xff]
    %v241 = vld [vmem:[#allocation7 + $0x100] sm:$0xff]
    %v242 = vld [vmem:[#allocation7 + $0x108] sm:$0xff]
    %v243 = vld [vmem:[#allocation7 + $0x110] sm:$0xff]
    %v244 = vld [vmem:[#allocation7 + $0x118] sm:$0xff]
    %v245 = vld [vmem:[#allocation7 + $0x120] sm:$0xff]
    %v246 = vld [vmem:[#allocation7 + $0x128] sm:$0xff]
    %v247 = vld [vmem:[#allocation7 + $0x130] sm:$0xff]
    %v248 = vld [vmem:[#allocation7 + $0x138] sm:$0xff]
    %v249 = vld [vmem:[#allocation7 + $0x140] sm:$0xff]
    %v250 = vld [vmem:[#allocation7 + $0x148] sm:$0xff]
    %v251 = vld [vmem:[#allocation7 + $0x150] sm:$0xff]
    %v252 = vld [vmem:[#allocation7 + $0x158] sm:$0xff]
    %v253 = vld [vmem:[#allocation7 + $0x160] sm:$0xff]
    %v254 = vld [vmem:[#allocation7 + $0x168] sm:$0xff]
    %v255 = vld [vmem:[#allocation7 + $0x170] sm:$0xff]
    %v256 = vld [vmem:[#allocation7 + $0x178] sm:$0xff]
    %v257 = vld [vmem:[#allocation7 + $0x180] sm:$0xff]
    %v258 = vld [vmem:[#allocation7 + $0x188] sm:$0xff]
    %v259 = vld [vmem:[#allocation7 + $0x190] sm:$0xff]
    %v260 = vld [vmem:[#allocation7 + $0x198] sm:$0xff]
    %v261 = vld [vmem:[#allocation7 + $0x1a0] sm:$0xff]
    %v262 = vld [vmem:[#allocation7 + $0x1a8] sm:$0xff]
    %v263 = vld [vmem:[#allocation7 + $0x1b0] sm:$0xff]
    %v264 = vld [vmem:[#allocation7 + $0x1b8] sm:$0xff]
    %v265 = vld [vmem:[#allocation7 + $0x1c0] sm:$0xff]
    %v266 = vld [vmem:[#allocation7 + $0x1c8] sm:$0xff]
    %v267 = vld [vmem:[#allocation7 + $0x1d0] sm:$0xff]
    %v268 = vld [vmem:[#allocation7 + $0x1d8] sm:$0xff]
    %v269 = vld [vmem:[#allocation7 + $0x1e0] sm:$0xff]
    %v270 = vld [vmem:[#allocation7 + $0x1e8] sm:$0xff]
    %v271 = vld [vmem:[#allocation7 + $0x1f0] sm:$0xff]
    %v272 = vld [vmem:[#allocation7 + $0x1f8] sm:$0xff]
    %v273 = vld [vmem:[%s4] sm:$0xf]
    %v275 = vlaneseq
    %v276 = vshrl.u32 %v275, 7
    %v277 = vsub.s32 0, %v276
    %v278 = vrot.slane %v273, %v277
    %v279 = vlaneseq
    %v280 = vshrl.u32 %v279, 7
    %v281 = vsub.s32 1, %v280
    %v282 = vrot.slane %v273, %v281
    %v283 = vlaneseq
    %v284 = vshrl.u32 %v283, 7
    %v285 = vsub.s32 2, %v284
    %v286 = vrot.slane %v273, %v285
    %v287 = vlaneseq
    %v288 = vshrl.u32 %v287, 7
    %v289 = vsub.s32 3, %v288
    %v290 = vrot.slane %v273, %v289
    %v359 = vunpack.c.l.b16 %v209
    %v360 = vunpack.c.h.b16 %v209
    %v361 = vunpack.c.l.b16 %v210
    %v362 = vunpack.c.h.b16 %v210
    %v363 = vunpack.c.l.b16 %v211
    %v364 = vunpack.c.h.b16 %v211
    %v365 = vunpack.c.l.b16 %v212
    %v366 = vunpack.c.h.b16 %v212
    %v367 = vunpack.c.l.b16 %v213
    %v368 = vunpack.c.h.b16 %v213
    %v369 = vunpack.c.l.b16 %v214
    %v370 = vunpack.c.h.b16 %v214
    %v371 = vunpack.c.l.b16 %v215
    %v372 = vunpack.c.h.b16 %v215
    %v373 = vunpack.c.l.b16 %v216
    %v374 = vunpack.c.h.b16 %v216
    %v375 = vunpack.c.l.b16 %v217
    %v376 = vunpack.c.h.b16 %v217
    %v377 = vunpack.c.l.b16 %v218
    %v378 = vunpack.c.h.b16 %v218
    %v379 = vunpack.c.l.b16 %v219
    %v380 = vunpack.c.h.b16 %v219
    %v381 = vunpack.c.l.b16 %v220
    %v382 = vunpack.c.h.b16 %v220
    %v383 = vunpack.c.l.b16 %v221
    %v384 = vunpack.c.h.b16 %v221
    %v385 = vunpack.c.l.b16 %v222
    %v386 = vunpack.c.h.b16 %v222
    %v387 = vunpack.c.l.b16 %v223
    %v388 = vunpack.c.h.b16 %v223
    %v389 = vunpack.c.l.b16 %v224
    %v390 = vunpack.c.h.b16 %v224
    %v391 = vunpack.c.l.b16 %v225
    %v392 = vunpack.c.h.b16 %v225
    %v393 = vunpack.c.l.b16 %v226
    %v394 = vunpack.c.h.b16 %v226
    %v395 = vunpack.c.l.b16 %v227
    %v396 = vunpack.c.h.b16 %v227
    %v397 = vunpack.c.l.b16 %v228
    %v398 = vunpack.c.h.b16 %v228
    %v399 = vunpack.c.l.b16 %v229
    %v400 = vunpack.c.h.b16 %v229
    %v401 = vunpack.c.l.b16 %v230
    %v402 = vunpack.c.h.b16 %v230
    %v403 = vunpack.c.l.b16 %v231
    %v404 = vunpack.c.h.b16 %v231
    %v405 = vunpack.c.l.b16 %v232
    %v406 = vunpack.c.h.b16 %v232
    %v407 = vunpack.c.l.b16 %v233
    %v408 = vunpack.c.h.b16 %v233
    %v409 = vunpack.c.l.b16 %v234
    %v410 = vunpack.c.h.b16 %v234
    %v411 = vunpack.c.l.b16 %v235
    %v412 = vunpack.c.h.b16 %v235
    %v413 = vunpack.c.l.b16 %v236
    %v414 = vunpack.c.h.b16 %v236
    %v415 = vunpack.c.l.b16 %v237
    %v416 = vunpack.c.h.b16 %v237
    %v417 = vunpack.c.l.b16 %v238
    %v418 = vunpack.c.h.b16 %v238
    %v419 = vunpack.c.l.b16 %v239
    %v420 = vunpack.c.h.b16 %v239
    %v421 = vunpack.c.l.b16 %v240
    %v422 = vunpack.c.h.b16 %v240
    %v423 = vunpack.c.l.b16 %v241
    %v424 = vunpack.c.h.b16 %v241
    %v425 = vunpack.c.l.b16 %v242
    %v426 = vunpack.c.h.b16 %v242
    %v427 = vunpack.c.l.b16 %v243
    %v428 = vunpack.c.h.b16 %v243
    %v429 = vunpack.c.l.b16 %v244
    %v430 = vunpack.c.h.b16 %v244
    %v431 = vunpack.c.l.b16 %v245
    %v432 = vunpack.c.h.b16 %v245
    %v433 = vunpack.c.l.b16 %v246
    %v434 = vunpack.c.h.b16 %v246
    %v435 = vunpack.c.l.b16 %v247
    %v436 = vunpack.c.h.b16 %v247
    %v437 = vunpack.c.l.b16 %v248
    %v438 = vunpack.c.h.b16 %v248
    %v439 = vunpack.c.l.b16 %v249
    %v440 = vunpack.c.h.b16 %v249
    %v441 = vunpack.c.l.b16 %v250
    %v442 = vunpack.c.h.b16 %v250
    %v443 = vunpack.c.l.b16 %v251
    %v444 = vunpack.c.h.b16 %v251
    %v445 = vunpack.c.l.b16 %v252
    %v446 = vunpack.c.h.b16 %v252
    %v447 = vunpack.c.l.b16 %v253
    %v448 = vunpack.c.h.b16 %v253
    %v449 = vunpack.c.l.b16 %v254
    %v450 = vunpack.c.h.b16 %v254
    %v451 = vunpack.c.l.b16 %v255
    %v452 = vunpack.c.h.b16 %v255
    %v453 = vunpack.c.l.b16 %v256
    %v454 = vunpack.c.h.b16 %v256
    %v455 = vunpack.c.l.b16 %v257
    %v456 = vunpack.c.h.b16 %v257
    %v457 = vunpack.c.l.b16 %v258
    %v458 = vunpack.c.h.b16 %v258
    %v459 = vunpack.c.l.b16 %v259
    %v460 = vunpack.c.h.b16 %v259
    %v461 = vunpack.c.l.b16 %v260
    %v462 = vunpack.c.h.b16 %v260
    %v463 = vunpack.c.l.b16 %v261
    %v464 = vunpack.c.h.b16 %v261
    %v465 = vunpack.c.l.b16 %v262
    %v466 = vunpack.c.h.b16 %v262
    %v467 = vunpack.c.l.b16 %v263
    %v468 = vunpack.c.h.b16 %v263
    %v469 = vunpack.c.l.b16 %v264
    %v470 = vunpack.c.h.b16 %v264
    %v471 = vunpack.c.l.b16 %v265
    %v472 = vunpack.c.h.b16 %v265
    %v473 = vunpack.c.l.b16 %v266
    %v474 = vunpack.c.h.b16 %v266
    %v475 = vunpack.c.l.b16 %v267
    %v476 = vunpack.c.h.b16 %v267
    %v477 = vunpack.c.l.b16 %v268
    %v478 = vunpack.c.h.b16 %v268
    %v479 = vunpack.c.l.b16 %v269
    %v480 = vunpack.c.h.b16 %v269
    %v481 = vunpack.c.l.b16 %v270
    %v482 = vunpack.c.h.b16 %v270
    %v483 = vunpack.c.l.b16 %v271
    %v484 = vunpack.c.h.b16 %v271
    %v485 = vunpack.c.l.b16 %v272
    %v486 = vunpack.c.h.b16 %v272
    %v487 = vpack.c.b16 %v363, %v359
    %v488 = vpack.c.b16 %v364, %v360
    %v489 = vpack.c.b16 %v365, %v361
    %v490 = vpack.c.b16 %v366, %v362
    %v491 = vpack.c.b16 %v371, %v367
    %v492 = vpack.c.b16 %v372, %v368
    %v493 = vpack.c.b16 %v373, %v369
    %v494 = vpack.c.b16 %v374, %v370
    %v495 = vpack.c.b16 %v379, %v375
    %v496 = vpack.c.b16 %v380, %v376
    %v497 = vpack.c.b16 %v381, %v377
    %v498 = vpack.c.b16 %v382, %v378
    %v499 = vpack.c.b16 %v387, %v383
    %v500 = vpack.c.b16 %v388, %v384
    %v501 = vpack.c.b16 %v389, %v385
    %v502 = vpack.c.b16 %v390, %v386
    %v503 = vpack.c.b16 %v395, %v391
    %v504 = vpack.c.b16 %v396, %v392
    %v505 = vpack.c.b16 %v397, %v393
    %v506 = vpack.c.b16 %v398, %v394
    %v507 = vpack.c.b16 %v403, %v399
    %v508 = vpack.c.b16 %v404, %v400
    %v509 = vpack.c.b16 %v405, %v401
    %v510 = vpack.c.b16 %v406, %v402
    %v511 = vpack.c.b16 %v411, %v407
    %v512 = vpack.c.b16 %v412, %v408
    %v513 = vpack.c.b16 %v413, %v409
    %v514 = vpack.c.b16 %v414, %v410
    %v515 = vpack.c.b16 %v419, %v415
    %v516 = vpack.c.b16 %v420, %v416
    %v517 = vpack.c.b16 %v421, %v417
    %v518 = vpack.c.b16 %v422, %v418
    %v519 = vpack.c.b16 %v427, %v423
    %v520 = vpack.c.b16 %v428, %v424
    %v521 = vpack.c.b16 %v429, %v425
    %v522 = vpack.c.b16 %v430, %v426
    %v523 = vpack.c.b16 %v435, %v431
    %v524 = vpack.c.b16 %v436, %v432
    %v525 = vpack.c.b16 %v437, %v433
    %v526 = vpack.c.b16 %v438, %v434
    %v527 = vpack.c.b16 %v443, %v439
    %v528 = vpack.c.b16 %v444, %v440
    %v529 = vpack.c.b16 %v445, %v441
    %v530 = vpack.c.b16 %v446, %v442
    %v531 = vpack.c.b16 %v451, %v447
    %v532 = vpack.c.b16 %v452, %v448
    %v533 = vpack.c.b16 %v453, %v449
    %v534 = vpack.c.b16 %v454, %v450
    %v535 = vpack.c.b16 %v459, %v455
    %v536 = vpack.c.b16 %v460, %v456
    %v537 = vpack.c.b16 %v461, %v457
    %v538 = vpack.c.b16 %v462, %v458
    %v539 = vpack.c.b16 %v467, %v463
    %v540 = vpack.c.b16 %v468, %v464
    %v541 = vpack.c.b16 %v469, %v465
    %v542 = vpack.c.b16 %v470, %v466
    %v543 = vpack.c.b16 %v475, %v471
    %v544 = vpack.c.b16 %v476, %v472
    %v545 = vpack.c.b16 %v477, %v473
    %v546 = vpack.c.b16 %v478, %v474
    %v547 = vpack.c.b16 %v483, %v479
    %v548 = vpack.c.b16 %v484, %v480
    %v549 = vpack.c.b16 %v485, %v481
    %v550 = vpack.c.b16 %v486, %v482
    %615 = vmatprep.subr.bf16.mxu0 %v488
    %616 = vmatpush1.bf16.msra.mxu0 %v487
    %617 = vmatprep.subr.bf16.mxu0 %v492
    %618 = vmatpush1.bf16.msra.mxu0 %v491
    %619 = vmatprep.subr.bf16.mxu0 %v496
    %620 = vmatpush1.bf16.msra.mxu0 %v495
    %621 = vmatprep.subr.bf16.mxu0 %v500
    %622 = vmatpush1.bf16.msra.mxu0 %v499
    %623 = vmatprep.subr.bf16.mxu0 %v504
    %624 = vmatpush1.bf16.msra.mxu0 %v503
    %625 = vmatprep.subr.bf16.mxu0 %v508
    %626 = vmatpush1.bf16.msra.mxu0 %v507
    %627 = vmatprep.subr.bf16.mxu0 %v512
    %628 = vmatpush1.bf16.msra.mxu0 %v511
    %629 = vmatprep.subr.bf16.mxu0 %v516
    %630 = vmatpush1.bf16.msra.mxu0 %v515
    %631 = vmatprep.subr.bf16.mxu0 %v520
    %632 = vmatpush1.bf16.msra.mxu0 %v519
    %633 = vmatprep.subr.bf16.mxu0 %v524
    %634 = vmatpush1.bf16.msra.mxu0 %v523
    %635 = vmatprep.subr.bf16.mxu0 %v528
    %636 = vmatpush1.bf16.msra.mxu0 %v527
    %637 = vmatprep.subr.bf16.mxu0 %v532
    %638 = vmatpush1.bf16.msra.mxu0 %v531
    %639 = vmatprep.subr.bf16.mxu0 %v536
    %640 = vmatpush1.bf16.msra.mxu0 %v535
    %641 = vmatprep.subr.bf16.mxu0 %v540
    %642 = vmatpush1.bf16.msra.mxu0 %v539
    %643 = vmatprep.subr.bf16.mxu0 %v544
    %644 = vmatpush1.bf16.msra.mxu0 %v543
    %645 = vmatprep.subr.bf16.mxu0 %v548
    %646 = vmatpush1.bf16.msra.mxu0 %v547
    %647 = vmatprep.mubr.bf16.mxu0 %v208
    %648 = vmatmul.mubr.bf16.gmra.mrb[0].mxu0 %v207
    %v649 = vpop.f32.mrb[0].mxu0
    %v650 = vadd.f32 %v278, %v649
    %v651 = vpop.f32.mrb[0].mxu0
    %v652 = vadd.f32 %v282, %v651
    %v653 = vpop.f32.mrb[0].mxu0
    %v654 = vadd.f32 %v278, %v653
    %v655 = vpop.f32.mrb[0].mxu0
    %v656 = vadd.f32 %v282, %v655
    %657 = vdwg.mxu0
    %658 = vmatprep.subr.bf16.mxu0 %v490
    %659 = vmatpush1.bf16.msra.mxu0 %v489
    %660 = vmatprep.subr.bf16.mxu0 %v494
    %661 = vmatpush1.bf16.msra.mxu0 %v493
    %662 = vmatprep.subr.bf16.mxu0 %v498
    %663 = vmatpush1.bf16.msra.mxu0 %v497
    %664 = vmatprep.subr.bf16.mxu0 %v502
    %665 = vmatpush1.bf16.msra.mxu0 %v501
    %666 = vmatprep.subr.bf16.mxu0 %v506
    %667 = vmatpush1.bf16.msra.mxu0 %v505
    %668 = vmatprep.subr.bf16.mxu0 %v510
    %669 = vmatpush1.bf16.msra.mxu0 %v509
    %670 = vmatprep.subr.bf16.mxu0 %v514
    %671 = vmatpush1.bf16.msra.mxu0 %v513
    %672 = vmatprep.subr.bf16.mxu0 %v518
    %673 = vmatpush1.bf16.msra.mxu0 %v517
    %674 = vmatprep.subr.bf16.mxu0 %v522
    %675 = vmatpush1.bf16.msra.mxu0 %v521
    %676 = vmatprep.subr.bf16.mxu0 %v526
    %677 = vmatpush1.bf16.msra.mxu0 %v525
    %678 = vmatprep.subr.bf16.mxu0 %v530
    %679 = vmatpush1.bf16.msra.mxu0 %v529
    %680 = vmatprep.subr.bf16.mxu0 %v534
    %681 = vmatpush1.bf16.msra.mxu0 %v533
    %682 = vmatprep.subr.bf16.mxu0 %v538
    %683 = vmatpush1.bf16.msra.mxu0 %v537
    %684 = vmatprep.subr.bf16.mxu0 %v542
    %685 = vmatpush1.bf16.msra.mxu0 %v541
    %686 = vmatprep.subr.bf16.mxu0 %v546
    %687 = vmatpush1.bf16.msra.mxu0 %v545
    %688 = vmatprep.subr.bf16.mxu0 %v550
    %689 = vmatpush1.bf16.msra.mxu0 %v549
    %690 = vmatprep.mubr.bf16.mxu0 %v208
    %691 = vmatmul.mubr.bf16.gmra.mrb[0].mxu0 %v207
    %v692 = vpop.f32.mrb[0].mxu0
    %v693 = vadd.f32 %v286, %v692
    %v694 = vpop.f32.mrb[0].mxu0
    %v695 = vadd.f32 %v290, %v694
    %v696 = vpop.f32.mrb[0].mxu0
    %v697 = vadd.f32 %v286, %v696
    %v698 = vpop.f32.mrb[0].mxu0
    %v699 = vadd.f32 %v290, %v698
    %700 = vdwg.mxu0
    %v701 = vmax.f32 %v650, 0.0
    %v702 = vmax.f32 %v652, 0.0
    %v703 = vmax.f32 %v693, 0.0
    %v704 = vmax.f32 %v695, 0.0
    %v705 = vmax.f32 %v654, 0.0
    %v706 = vmax.f32 %v656, 0.0
    %v707 = vmax.f32 %v697, 0.0
    %v708 = vmax.f32 %v699, 0.0
    %v709 = vpack.c.bf16 %v705, %v701
    %v710 = vpack.c.bf16 %v706, %v702
    %v711 = vpack.c.bf16 %v707, %v703
    %v712 = vpack.c.bf16 %v708, %v704
    %v713 = vld [vmem:[#allocation8] sm:$0xff]
    %v714 = vld [vmem:[#allocation8 + $0x8] sm:$0xff]
    %v715 = vld [vmem:[#allocation8 + $0x10] sm:$0xff]
    %v716 = vld [vmem:[#allocation8 + $0x18] sm:$0xff]
    %v717 = vld [vmem:[#allocation8 + $0x20] sm:$0xff]
    %v718 = vld [vmem:[#allocation8 + $0x28] sm:$0xff]
    %v719 = vld [vmem:[#allocation8 + $0x30] sm:$0xff]
    %v720 = vld [vmem:[#allocation8 + $0x38] sm:$0xff]
    %v721 = vld [vmem:[#allocation8 + $0x40] sm:$0xff]
    %v722 = vld [vmem:[#allocation8 + $0x48] sm:$0xff]
    %v723 = vld [vmem:[#allocation8 + $0x50] sm:$0xff]
    %v724 = vld [vmem:[#allocation8 + $0x58] sm:$0xff]
    %v725 = vld [vmem:[#allocation8 + $0x60] sm:$0xff]
    %v726 = vld [vmem:[#allocation8 + $0x68] sm:$0xff]
    %v727 = vld [vmem:[#allocation8 + $0x70] sm:$0xff]
    %v728 = vld [vmem:[#allocation8 + $0x78] sm:$0xff]
    %v729 = vld [vmem:[#allocation8 + $0x80] sm:$0xff]
    %v730 = vld [vmem:[#allocation8 + $0x88] sm:$0xff]
    %v731 = vld [vmem:[#allocation8 + $0x90] sm:$0xff]
    %v732 = vld [vmem:[#allocation8 + $0x98] sm:$0xff]
    %v733 = vld [vmem:[#allocation8 + $0xa0] sm:$0xff]
    %v734 = vld [vmem:[#allocation8 + $0xa8] sm:$0xff]
    %v735 = vld [vmem:[#allocation8 + $0xb0] sm:$0xff]
    %v736 = vld [vmem:[#allocation8 + $0xb8] sm:$0xff]
    %v737 = vld [vmem:[#allocation8 + $0xc0] sm:$0xff]
    %v738 = vld [vmem:[#allocation8 + $0xc8] sm:$0xff]
    %v739 = vld [vmem:[#allocation8 + $0xd0] sm:$0xff]
    %v740 = vld [vmem:[#allocation8 + $0xd8] sm:$0xff]
    %v741 = vld [vmem:[#allocation8 + $0xe0] sm:$0xff]
    %v742 = vld [vmem:[#allocation8 + $0xe8] sm:$0xff]
    %v743 = vld [vmem:[#allocation8 + $0xf0] sm:$0xff]
    %v744 = vld [vmem:[#allocation8 + $0xf8] sm:$0xff]
    %v745 = vld [vmem:[#allocation8 + $0x100] sm:$0xff]
    %v746 = vld [vmem:[#allocation8 + $0x108] sm:$0xff]
    %v747 = vld [vmem:[#allocation8 + $0x110] sm:$0xff]
    %v748 = vld [vmem:[#allocation8 + $0x118] sm:$0xff]
    %v749 = vld [vmem:[#allocation8 + $0x120] sm:$0xff]
    %v750 = vld [vmem:[#allocation8 + $0x128] sm:$0xff]
    %v751 = vld [vmem:[#allocation8 + $0x130] sm:$0xff]
    %v752 = vld [vmem:[#allocation8 + $0x138] sm:$0xff]
    %v753 = vld [vmem:[#allocation8 + $0x140] sm:$0xff]
    %v754 = vld [vmem:[#allocation8 + $0x148] sm:$0xff]
    %v755 = vld [vmem:[#allocation8 + $0x150] sm:$0xff]
    %v756 = vld [vmem:[#allocation8 + $0x158] sm:$0xff]
    %v757 = vld [vmem:[#allocation8 + $0x160] sm:$0xff]
    %v758 = vld [vmem:[#allocation8 + $0x168] sm:$0xff]
    %v759 = vld [vmem:[#allocation8 + $0x170] sm:$0xff]
    %v760 = vld [vmem:[#allocation8 + $0x178] sm:$0xff]
    %v761 = vld [vmem:[#allocation8 + $0x180] sm:$0xff]
    %v762 = vld [vmem:[#allocation8 + $0x188] sm:$0xff]
    %v763 = vld [vmem:[#allocation8 + $0x190] sm:$0xff]
    %v764 = vld [vmem:[#allocation8 + $0x198] sm:$0xff]
    %v765 = vld [vmem:[#allocation8 + $0x1a0] sm:$0xff]
    %v766 = vld [vmem:[#allocation8 + $0x1a8] sm:$0xff]
    %v767 = vld [vmem:[#allocation8 + $0x1b0] sm:$0xff]
    %v768 = vld [vmem:[#allocation8 + $0x1b8] sm:$0xff]
    %v769 = vld [vmem:[#allocation8 + $0x1c0] sm:$0xff]
    %v770 = vld [vmem:[#allocation8 + $0x1c8] sm:$0xff]
    %v771 = vld [vmem:[#allocation8 + $0x1d0] sm:$0xff]
    %v772 = vld [vmem:[#allocation8 + $0x1d8] sm:$0xff]
    %v773 = vld [vmem:[#allocation8 + $0x1e0] sm:$0xff]
    %v774 = vld [vmem:[#allocation8 + $0x1e8] sm:$0xff]
    %v775 = vld [vmem:[#allocation8 + $0x1f0] sm:$0xff]
    %v776 = vld [vmem:[#allocation8 + $0x1f8] sm:$0xff]
    %v777 = vld [vmem:[#allocation8 + $0x200] sm:$0xff]
    %v778 = vld [vmem:[#allocation8 + $0x208] sm:$0xff]
    %v779 = vld [vmem:[#allocation8 + $0x210] sm:$0xff]
    %v780 = vld [vmem:[#allocation8 + $0x218] sm:$0xff]
    %v781 = vld [vmem:[#allocation8 + $0x220] sm:$0xff]
    %v782 = vld [vmem:[#allocation8 + $0x228] sm:$0xff]
    %v783 = vld [vmem:[#allocation8 + $0x230] sm:$0xff]
    %v784 = vld [vmem:[#allocation8 + $0x238] sm:$0xff]
    %v785 = vld [vmem:[#allocation8 + $0x240] sm:$0xff]
    %v786 = vld [vmem:[#allocation8 + $0x248] sm:$0xff]
    %v787 = vld [vmem:[#allocation8 + $0x250] sm:$0xff]
    %v788 = vld [vmem:[#allocation8 + $0x258] sm:$0xff]
    %v789 = vld [vmem:[#allocation8 + $0x260] sm:$0xff]
    %v790 = vld [vmem:[#allocation8 + $0x268] sm:$0xff]
    %v791 = vld [vmem:[#allocation8 + $0x270] sm:$0xff]
    %v792 = vld [vmem:[#allocation8 + $0x278] sm:$0xff]
    %v793 = vld [vmem:[#allocation8 + $0x280] sm:$0xff]
    %v794 = vld [vmem:[#allocation8 + $0x288] sm:$0xff]
    %v795 = vld [vmem:[#allocation8 + $0x290] sm:$0xff]
    %v796 = vld [vmem:[#allocation8 + $0x298] sm:$0xff]
    %v797 = vld [vmem:[#allocation8 + $0x2a0] sm:$0xff]
    %v798 = vld [vmem:[#allocation8 + $0x2a8] sm:$0xff]
    %v799 = vld [vmem:[#allocation8 + $0x2b0] sm:$0xff]
    %v800 = vld [vmem:[#allocation8 + $0x2b8] sm:$0xff]
    %v801 = vld [vmem:[#allocation8 + $0x2c0] sm:$0xff]
    %v802 = vld [vmem:[#allocation8 + $0x2c8] sm:$0xff]
    %v803 = vld [vmem:[#allocation8 + $0x2d0] sm:$0xff]
    %v804 = vld [vmem:[#allocation8 + $0x2d8] sm:$0xff]
    %v805 = vld [vmem:[#allocation8 + $0x2e0] sm:$0xff]
    %v806 = vld [vmem:[#allocation8 + $0x2e8] sm:$0xff]
    %v807 = vld [vmem:[#allocation8 + $0x2f0] sm:$0xff]
    %v808 = vld [vmem:[#allocation8 + $0x2f8] sm:$0xff]
    %v809 = vld [vmem:[#allocation8 + $0x300] sm:$0xff]
    %v810 = vld [vmem:[#allocation8 + $0x308] sm:$0xff]
    %v811 = vld [vmem:[#allocation8 + $0x310] sm:$0xff]
    %v812 = vld [vmem:[#allocation8 + $0x318] sm:$0xff]
    %v813 = vld [vmem:[#allocation8 + $0x320] sm:$0xff]
    %v814 = vld [vmem:[#allocation8 + $0x328] sm:$0xff]
    %v815 = vld [vmem:[#allocation8 + $0x330] sm:$0xff]
    %v816 = vld [vmem:[#allocation8 + $0x338] sm:$0xff]
    %v817 = vld [vmem:[#allocation8 + $0x340] sm:$0xff]
    %v818 = vld [vmem:[#allocation8 + $0x348] sm:$0xff]
    %v819 = vld [vmem:[#allocation8 + $0x350] sm:$0xff]
    %v820 = vld [vmem:[#allocation8 + $0x358] sm:$0xff]
    %v821 = vld [vmem:[#allocation8 + $0x360] sm:$0xff]
    %v822 = vld [vmem:[#allocation8 + $0x368] sm:$0xff]
    %v823 = vld [vmem:[#allocation8 + $0x370] sm:$0xff]
    %v824 = vld [vmem:[#allocation8 + $0x378] sm:$0xff]
    %v825 = vld [vmem:[#allocation8 + $0x380] sm:$0xff]
    %v826 = vld [vmem:[#allocation8 + $0x388] sm:$0xff]
    %v827 = vld [vmem:[#allocation8 + $0x390] sm:$0xff]
    %v828 = vld [vmem:[#allocation8 + $0x398] sm:$0xff]
    %v829 = vld [vmem:[#allocation8 + $0x3a0] sm:$0xff]
    %v830 = vld [vmem:[#allocation8 + $0x3a8] sm:$0xff]
    %v831 = vld [vmem:[#allocation8 + $0x3b0] sm:$0xff]
    %v832 = vld [vmem:[#allocation8 + $0x3b8] sm:$0xff]
    %v833 = vld [vmem:[#allocation8 + $0x3c0] sm:$0xff]
    %v834 = vld [vmem:[#allocation8 + $0x3c8] sm:$0xff]
    %v835 = vld [vmem:[#allocation8 + $0x3d0] sm:$0xff]
    %v836 = vld [vmem:[#allocation8 + $0x3d8] sm:$0xff]
    %v837 = vld [vmem:[#allocation8 + $0x3e0] sm:$0xff]
    %v838 = vld [vmem:[#allocation8 + $0x3e8] sm:$0xff]
    %v839 = vld [vmem:[#allocation8 + $0x3f0] sm:$0xff]
    %v840 = vld [vmem:[#allocation8 + $0x3f8] sm:$0xff]
    %v841 = vld [vmem:[%s6] sm:$0xf]
    %v843 = vlaneseq
    %v844 = vshrl.u32 %v843, 7
    %v845 = vsub.s32 0, %v844
    %v846 = vrot.slane %v841, %v845
    %v847 = vlaneseq
    %v848 = vshrl.u32 %v847, 7
    %v849 = vsub.s32 1, %v848
    %v850 = vrot.slane %v841, %v849
    %v851 = vlaneseq
    %v852 = vshrl.u32 %v851, 7
    %v853 = vsub.s32 2, %v852
    %v854 = vrot.slane %v841, %v853
    %v855 = vlaneseq
    %v856 = vshrl.u32 %v855, 7
    %v857 = vsub.s32 3, %v856
    %v858 = vrot.slane %v841, %v857
    %v991 = vunpack.c.l.b16 %v713
    %v992 = vunpack.c.h.b16 %v713
    %v993 = vunpack.c.l.b16 %v714
    %v994 = vunpack.c.h.b16 %v714
    %v995 = vunpack.c.l.b16 %v715
    %v996 = vunpack.c.h.b16 %v715
    %v997 = vunpack.c.l.b16 %v716
    %v998 = vunpack.c.h.b16 %v716
    %v999 = vunpack.c.l.b16 %v717
    %v1000 = vunpack.c.h.b16 %v717
    %v1001 = vunpack.c.l.b16 %v718
    %v1002 = vunpack.c.h.b16 %v718
    %v1003 = vunpack.c.l.b16 %v719
    %v1004 = vunpack.c.h.b16 %v719
    %v1005 = vunpack.c.l.b16 %v720
    %v1006 = vunpack.c.h.b16 %v720
    %v1007 = vunpack.c.l.b16 %v721
    %v1008 = vunpack.c.h.b16 %v721
    %v1009 = vunpack.c.l.b16 %v722
    %v1010 = vunpack.c.h.b16 %v722
    %v1011 = vunpack.c.l.b16 %v723
    %v1012 = vunpack.c.h.b16 %v723
    %v1013 = vunpack.c.l.b16 %v724
    %v1014 = vunpack.c.h.b16 %v724
    %v1015 = vunpack.c.l.b16 %v725
    %v1016 = vunpack.c.h.b16 %v725
    %v1017 = vunpack.c.l.b16 %v726
    %v1018 = vunpack.c.h.b16 %v726
    %v1019 = vunpack.c.l.b16 %v727
    %v1020 = vunpack.c.h.b16 %v727
    %v1021 = vunpack.c.l.b16 %v728
    %v1022 = vunpack.c.h.b16 %v728
    %v1023 = vunpack.c.l.b16 %v729
    %v1024 = vunpack.c.h.b16 %v729
    %v1025 = vunpack.c.l.b16 %v730
    %v1026 = vunpack.c.h.b16 %v730
    %v1027 = vunpack.c.l.b16 %v731
    %v1028 = vunpack.c.h.b16 %v731
    %v1029 = vunpack.c.l.b16 %v732
    %v1030 = vunpack.c.h.b16 %v732
    %v1031 = vunpack.c.l.b16 %v733
    %v1032 = vunpack.c.h.b16 %v733
    %v1033 = vunpack.c.l.b16 %v734
    %v1034 = vunpack.c.h.b16 %v734
    %v1035 = vunpack.c.l.b16 %v735
    %v1036 = vunpack.c.h.b16 %v735
    %v1037 = vunpack.c.l.b16 %v736
    %v1038 = vunpack.c.h.b16 %v736
    %v1039 = vunpack.c.l.b16 %v737
    %v1040 = vunpack.c.h.b16 %v737
    %v1041 = vunpack.c.l.b16 %v738
    %v1042 = vunpack.c.h.b16 %v738
    %v1043 = vunpack.c.l.b16 %v739
    %v1044 = vunpack.c.h.b16 %v739
    %v1045 = vunpack.c.l.b16 %v740
    %v1046 = vunpack.c.h.b16 %v740
    %v1047 = vunpack.c.l.b16 %v741
    %v1048 = vunpack.c.h.b16 %v741
    %v1049 = vunpack.c.l.b16 %v742
    %v1050 = vunpack.c.h.b16 %v742
    %v1051 = vunpack.c.l.b16 %v743
    %v1052 = vunpack.c.h.b16 %v743
    %v1053 = vunpack.c.l.b16 %v744
    %v1054 = vunpack.c.h.b16 %v744
    %v1055 = vunpack.c.l.b16 %v745
    %v1056 = vunpack.c.h.b16 %v745
    %v1057 = vunpack.c.l.b16 %v746
    %v1058 = vunpack.c.h.b16 %v746
    %v1059 = vunpack.c.l.b16 %v747
    %v1060 = vunpack.c.h.b16 %v747
    %v1061 = vunpack.c.l.b16 %v748
    %v1062 = vunpack.c.h.b16 %v748
    %v1063 = vunpack.c.l.b16 %v749
    %v1064 = vunpack.c.h.b16 %v749
    %v1065 = vunpack.c.l.b16 %v750
    %v1066 = vunpack.c.h.b16 %v750
    %v1067 = vunpack.c.l.b16 %v751
    %v1068 = vunpack.c.h.b16 %v751
    %v1069 = vunpack.c.l.b16 %v752
    %v1070 = vunpack.c.h.b16 %v752
    %v1071 = vunpack.c.l.b16 %v753
    %v1072 = vunpack.c.h.b16 %v753
    %v1073 = vunpack.c.l.b16 %v754
    %v1074 = vunpack.c.h.b16 %v754
    %v1075 = vunpack.c.l.b16 %v755
    %v1076 = vunpack.c.h.b16 %v755
    %v1077 = vunpack.c.l.b16 %v756
    %v1078 = vunpack.c.h.b16 %v756
    %v1079 = vunpack.c.l.b16 %v757
    %v1080 = vunpack.c.h.b16 %v757
    %v1081 = vunpack.c.l.b16 %v758
    %v1082 = vunpack.c.h.b16 %v758
    %v1083 = vunpack.c.l.b16 %v759
    %v1084 = vunpack.c.h.b16 %v759
    %v1085 = vunpack.c.l.b16 %v760
    %v1086 = vunpack.c.h.b16 %v760
    %v1087 = vunpack.c.l.b16 %v761
    %v1088 = vunpack.c.h.b16 %v761
    %v1089 = vunpack.c.l.b16 %v762
    %v1090 = vunpack.c.h.b16 %v762
    %v1091 = vunpack.c.l.b16 %v763
    %v1092 = vunpack.c.h.b16 %v763
    %v1093 = vunpack.c.l.b16 %v764
    %v1094 = vunpack.c.h.b16 %v764
    %v1095 = vunpack.c.l.b16 %v765
    %v1096 = vunpack.c.h.b16 %v765
    %v1097 = vunpack.c.l.b16 %v766
    %v1098 = vunpack.c.h.b16 %v766
    %v1099 = vunpack.c.l.b16 %v767
    %v1100 = vunpack.c.h.b16 %v767
    %v1101 = vunpack.c.l.b16 %v768
    %v1102 = vunpack.c.h.b16 %v768
    %v1103 = vunpack.c.l.b16 %v769
    %v1104 = vunpack.c.h.b16 %v769
    %v1105 = vunpack.c.l.b16 %v770
    %v1106 = vunpack.c.h.b16 %v770
    %v1107 = vunpack.c.l.b16 %v771
    %v1108 = vunpack.c.h.b16 %v771
    %v1109 = vunpack.c.l.b16 %v772
    %v1110 = vunpack.c.h.b16 %v772
    %v1111 = vunpack.c.l.b16 %v773
    %v1112 = vunpack.c.h.b16 %v773
    %v1113 = vunpack.c.l.b16 %v774
    %v1114 = vunpack.c.h.b16 %v774
    %v1115 = vunpack.c.l.b16 %v775
    %v1116 = vunpack.c.h.b16 %v775
    %v1117 = vunpack.c.l.b16 %v776
    %v1118 = vunpack.c.h.b16 %v776
    %v1119 = vunpack.c.l.b16 %v777
    %v1120 = vunpack.c.h.b16 %v777
    %v1121 = vunpack.c.l.b16 %v778
    %v1122 = vunpack.c.h.b16 %v778
    %v1123 = vunpack.c.l.b16 %v779
    %v1124 = vunpack.c.h.b16 %v779
    %v1125 = vunpack.c.l.b16 %v780
    %v1126 = vunpack.c.h.b16 %v780
    %v1127 = vunpack.c.l.b16 %v781
    %v1128 = vunpack.c.h.b16 %v781
    %v1129 = vunpack.c.l.b16 %v782
    %v1130 = vunpack.c.h.b16 %v782
    %v1131 = vunpack.c.l.b16 %v783
    %v1132 = vunpack.c.h.b16 %v783
    %v1133 = vunpack.c.l.b16 %v784
    %v1134 = vunpack.c.h.b16 %v784
    %v1135 = vunpack.c.l.b16 %v785
    %v1136 = vunpack.c.h.b16 %v785
    %v1137 = vunpack.c.l.b16 %v786
    %v1138 = vunpack.c.h.b16 %v786
    %v1139 = vunpack.c.l.b16 %v787
    %v1140 = vunpack.c.h.b16 %v787
    %v1141 = vunpack.c.l.b16 %v788
    %v1142 = vunpack.c.h.b16 %v788
    %v1143 = vunpack.c.l.b16 %v789
    %v1144 = vunpack.c.h.b16 %v789
    %v1145 = vunpack.c.l.b16 %v790
    %v1146 = vunpack.c.h.b16 %v790
    %v1147 = vunpack.c.l.b16 %v791
    %v1148 = vunpack.c.h.b16 %v791
    %v1149 = vunpack.c.l.b16 %v792
    %v1150 = vunpack.c.h.b16 %v792
    %v1151 = vunpack.c.l.b16 %v793
    %v1152 = vunpack.c.h.b16 %v793
    %v1153 = vunpack.c.l.b16 %v794
    %v1154 = vunpack.c.h.b16 %v794
    %v1155 = vunpack.c.l.b16 %v795
    %v1156 = vunpack.c.h.b16 %v795
    %v1157 = vunpack.c.l.b16 %v796
    %v1158 = vunpack.c.h.b16 %v796
    %v1159 = vunpack.c.l.b16 %v797
    %v1160 = vunpack.c.h.b16 %v797
    %v1161 = vunpack.c.l.b16 %v798
    %v1162 = vunpack.c.h.b16 %v798
    %v1163 = vunpack.c.l.b16 %v799
    %v1164 = vunpack.c.h.b16 %v799
    %v1165 = vunpack.c.l.b16 %v800
    %v1166 = vunpack.c.h.b16 %v800
    %v1167 = vunpack.c.l.b16 %v801
    %v1168 = vunpack.c.h.b16 %v801
    %v1169 = vunpack.c.l.b16 %v802
    %v1170 = vunpack.c.h.b16 %v802
    %v1171 = vunpack.c.l.b16 %v803
    %v1172 = vunpack.c.h.b16 %v803
    %v1173 = vunpack.c.l.b16 %v804
    %v1174 = vunpack.c.h.b16 %v804
    %v1175 = vunpack.c.l.b16 %v805
    %v1176 = vunpack.c.h.b16 %v805
    %v1177 = vunpack.c.l.b16 %v806
    %v1178 = vunpack.c.h.b16 %v806
    %v1179 = vunpack.c.l.b16 %v807
    %v1180 = vunpack.c.h.b16 %v807
    %v1181 = vunpack.c.l.b16 %v808
    %v1182 = vunpack.c.h.b16 %v808
    %v1183 = vunpack.c.l.b16 %v809
    %v1184 = vunpack.c.h.b16 %v809
    %v1185 = vunpack.c.l.b16 %v810
    %v1186 = vunpack.c.h.b16 %v810
    %v1187 = vunpack.c.l.b16 %v811
    %v1188 = vunpack.c.h.b16 %v811
    %v1189 = vunpack.c.l.b16 %v812
    %v1190 = vunpack.c.h.b16 %v812
    %v1191 = vunpack.c.l.b16 %v813
    %v1192 = vunpack.c.h.b16 %v813
    %v1193 = vunpack.c.l.b16 %v814
    %v1194 = vunpack.c.h.b16 %v814
    %v1195 = vunpack.c.l.b16 %v815
    %v1196 = vunpack.c.h.b16 %v815
    %v1197 = vunpack.c.l.b16 %v816
    %v1198 = vunpack.c.h.b16 %v816
    %v1199 = vunpack.c.l.b16 %v817
    %v1200 = vunpack.c.h.b16 %v817
    %v1201 = vunpack.c.l.b16 %v818
    %v1202 = vunpack.c.h.b16 %v818
    %v1203 = vunpack.c.l.b16 %v819
    %v1204 = vunpack.c.h.b16 %v819
    %v1205 = vunpack.c.l.b16 %v820
    %v1206 = vunpack.c.h.b16 %v820
    %v1207 = vunpack.c.l.b16 %v821
    %v1208 = vunpack.c.h.b16 %v821
    %v1209 = vunpack.c.l.b16 %v822
    %v1210 = vunpack.c.h.b16 %v822
    %v1211 = vunpack.c.l.b16 %v823
    %v1212 = vunpack.c.h.b16 %v823
    %v1213 = vunpack.c.l.b16 %v824
    %v1214 = vunpack.c.h.b16 %v824
    %v1215 = vunpack.c.l.b16 %v825
    %v1216 = vunpack.c.h.b16 %v825
    %v1217 = vunpack.c.l.b16 %v826
    %v1218 = vunpack.c.h.b16 %v826
    %v1219 = vunpack.c.l.b16 %v827
    %v1220 = vunpack.c.h.b16 %v827
    %v1221 = vunpack.c.l.b16 %v828
    %v1222 = vunpack.c.h.b16 %v828
    %v1223 = vunpack.c.l.b16 %v829
    %v1224 = vunpack.c.h.b16 %v829
    %v1225 = vunpack.c.l.b16 %v830
    %v1226 = vunpack.c.h.b16 %v830
    %v1227 = vunpack.c.l.b16 %v831
    %v1228 = vunpack.c.h.b16 %v831
    %v1229 = vunpack.c.l.b16 %v832
    %v1230 = vunpack.c.h.b16 %v832
    %v1231 = vunpack.c.l.b16 %v833
    %v1232 = vunpack.c.h.b16 %v833
    %v1233 = vunpack.c.l.b16 %v834
    %v1234 = vunpack.c.h.b16 %v834
    %v1235 = vunpack.c.l.b16 %v835
    %v1236 = vunpack.c.h.b16 %v835
    %v1237 = vunpack.c.l.b16 %v836
    %v1238 = vunpack.c.h.b16 %v836
    %v1239 = vunpack.c.l.b16 %v837
    %v1240 = vunpack.c.h.b16 %v837
    %v1241 = vunpack.c.l.b16 %v838
    %v1242 = vunpack.c.h.b16 %v838
    %v1243 = vunpack.c.l.b16 %v839
    %v1244 = vunpack.c.h.b16 %v839
    %v1245 = vunpack.c.l.b16 %v840
    %v1246 = vunpack.c.h.b16 %v840
    %v1247 = vpack.c.b16 %v995, %v991
    %v1248 = vpack.c.b16 %v996, %v992
    %v1249 = vpack.c.b16 %v997, %v993
    %v1250 = vpack.c.b16 %v998, %v994
    %v1251 = vpack.c.b16 %v1003, %v999
    %v1252 = vpack.c.b16 %v1004, %v1000
    %v1253 = vpack.c.b16 %v1005, %v1001
    %v1254 = vpack.c.b16 %v1006, %v1002
    %v1255 = vpack.c.b16 %v1011, %v1007
    %v1256 = vpack.c.b16 %v1012, %v1008
    %v1257 = vpack.c.b16 %v1013, %v1009
    %v1258 = vpack.c.b16 %v1014, %v1010
    %v1259 = vpack.c.b16 %v1019, %v1015
    %v1260 = vpack.c.b16 %v1020, %v1016
    %v1261 = vpack.c.b16 %v1021, %v1017
    %v1262 = vpack.c.b16 %v1022, %v1018
    %v1263 = vpack.c.b16 %v1027, %v1023
    %v1264 = vpack.c.b16 %v1028, %v1024
    %v1265 = vpack.c.b16 %v1029, %v1025
    %v1266 = vpack.c.b16 %v1030, %v1026
    %v1267 = vpack.c.b16 %v1035, %v1031
    %v1268 = vpack.c.b16 %v1036, %v1032
    %v1269 = vpack.c.b16 %v1037, %v1033
    %v1270 = vpack.c.b16 %v1038, %v1034
    %v1271 = vpack.c.b16 %v1043, %v1039
    %v1272 = vpack.c.b16 %v1044, %v1040
    %v1273 = vpack.c.b16 %v1045, %v1041
    %v1274 = vpack.c.b16 %v1046, %v1042
    %v1275 = vpack.c.b16 %v1051, %v1047
    %v1276 = vpack.c.b16 %v1052, %v1048
    %v1277 = vpack.c.b16 %v1053, %v1049
    %v1278 = vpack.c.b16 %v1054, %v1050
    %v1279 = vpack.c.b16 %v1059, %v1055
    %v1280 = vpack.c.b16 %v1060, %v1056
    %v1281 = vpack.c.b16 %v1061, %v1057
    %v1282 = vpack.c.b16 %v1062, %v1058
    %v1283 = vpack.c.b16 %v1067, %v1063
    %v1284 = vpack.c.b16 %v1068, %v1064
    %v1285 = vpack.c.b16 %v1069, %v1065
    %v1286 = vpack.c.b16 %v1070, %v1066
    %v1287 = vpack.c.b16 %v1075, %v1071
    %v1288 = vpack.c.b16 %v1076, %v1072
    %v1289 = vpack.c.b16 %v1077, %v1073
    %v1290 = vpack.c.b16 %v1078, %v1074
    %v1291 = vpack.c.b16 %v1083, %v1079
    %v1292 = vpack.c.b16 %v1084, %v1080
    %v1293 = vpack.c.b16 %v1085, %v1081
    %v1294 = vpack.c.b16 %v1086, %v1082
    %v1295 = vpack.c.b16 %v1091, %v1087
    %v1296 = vpack.c.b16 %v1092, %v1088
    %v1297 = vpack.c.b16 %v1093, %v1089
    %v1298 = vpack.c.b16 %v1094, %v1090
    %v1299 = vpack.c.b16 %v1099, %v1095
    %v1300 = vpack.c.b16 %v1100, %v1096
    %v1301 = vpack.c.b16 %v1101, %v1097
    %v1302 = vpack.c.b16 %v1102, %v1098
    %v1303 = vpack.c.b16 %v1107, %v1103
    %v1304 = vpack.c.b16 %v1108, %v1104
    %v1305 = vpack.c.b16 %v1109, %v1105
    %v1306 = vpack.c.b16 %v1110, %v1106
    %v1307 = vpack.c.b16 %v1115, %v1111
    %v1308 = vpack.c.b16 %v1116, %v1112
    %v1309 = vpack.c.b16 %v1117, %v1113
    %v1310 = vpack.c.b16 %v1118, %v1114
    %v1311 = vpack.c.b16 %v1123, %v1119
    %v1312 = vpack.c.b16 %v1124, %v1120
    %v1313 = vpack.c.b16 %v1125, %v1121
    %v1314 = vpack.c.b16 %v1126, %v1122
    %v1315 = vpack.c.b16 %v1131, %v1127
    %v1316 = vpack.c.b16 %v1132, %v1128
    %v1317 = vpack.c.b16 %v1133, %v1129
    %v1318 = vpack.c.b16 %v1134, %v1130
    %v1319 = vpack.c.b16 %v1139, %v1135
    %v1320 = vpack.c.b16 %v1140, %v1136
    %v1321 = vpack.c.b16 %v1141, %v1137
    %v1322 = vpack.c.b16 %v1142, %v1138
    %v1323 = vpack.c.b16 %v1147, %v1143
    %v1324 = vpack.c.b16 %v1148, %v1144
    %v1325 = vpack.c.b16 %v1149, %v1145
    %v1326 = vpack.c.b16 %v1150, %v1146
    %v1327 = vpack.c.b16 %v1155, %v1151
    %v1328 = vpack.c.b16 %v1156, %v1152
    %v1329 = vpack.c.b16 %v1157, %v1153
    %v1330 = vpack.c.b16 %v1158, %v1154
    %v1331 = vpack.c.b16 %v1163, %v1159
    %v1332 = vpack.c.b16 %v1164, %v1160
    %v1333 = vpack.c.b16 %v1165, %v1161
    %v1334 = vpack.c.b16 %v1166, %v1162
    %v1335 = vpack.c.b16 %v1171, %v1167
    %v1336 = vpack.c.b16 %v1172, %v1168
    %v1337 = vpack.c.b16 %v1173, %v1169
    %v1338 = vpack.c.b16 %v1174, %v1170
    %v1339 = vpack.c.b16 %v1179, %v1175
    %v1340 = vpack.c.b16 %v1180, %v1176
    %v1341 = vpack.c.b16 %v1181, %v1177
    %v1342 = vpack.c.b16 %v1182, %v1178
    %v1343 = vpack.c.b16 %v1187, %v1183
    %v1344 = vpack.c.b16 %v1188, %v1184
    %v1345 = vpack.c.b16 %v1189, %v1185
    %v1346 = vpack.c.b16 %v1190, %v1186
    %v1347 = vpack.c.b16 %v1195, %v1191
    %v1348 = vpack.c.b16 %v1196, %v1192
    %v1349 = vpack.c.b16 %v1197, %v1193
    %v1350 = vpack.c.b16 %v1198, %v1194
    %v1351 = vpack.c.b16 %v1203, %v1199
    %v1352 = vpack.c.b16 %v1204, %v1200
    %v1353 = vpack.c.b16 %v1205, %v1201
    %v1354 = vpack.c.b16 %v1206, %v1202
    %v1355 = vpack.c.b16 %v1211, %v1207
    %v1356 = vpack.c.b16 %v1212, %v1208
    %v1357 = vpack.c.b16 %v1213, %v1209
    %v1358 = vpack.c.b16 %v1214, %v1210
    %v1359 = vpack.c.b16 %v1219, %v1215
    %v1360 = vpack.c.b16 %v1220, %v1216
    %v1361 = vpack.c.b16 %v1221, %v1217
    %v1362 = vpack.c.b16 %v1222, %v1218
    %v1363 = vpack.c.b16 %v1227, %v1223
    %v1364 = vpack.c.b16 %v1228, %v1224
    %v1365 = vpack.c.b16 %v1229, %v1225
    %v1366 = vpack.c.b16 %v1230, %v1226
    %v1367 = vpack.c.b16 %v1235, %v1231
    %v1368 = vpack.c.b16 %v1236, %v1232
    %v1369 = vpack.c.b16 %v1237, %v1233
    %v1370 = vpack.c.b16 %v1238, %v1234
    %v1371 = vpack.c.b16 %v1243, %v1239
    %v1372 = vpack.c.b16 %v1244, %v1240
    %v1373 = vpack.c.b16 %v1245, %v1241
    %v1374 = vpack.c.b16 %v1246, %v1242
    %1503 = vmatprep.subr.bf16.mxu0 %v1248
    %1504 = vmatpush1.bf16.msra.mxu0 %v1247
    %1505 = vmatprep.subr.bf16.mxu0 %v1252
    %1506 = vmatpush1.bf16.msra.mxu0 %v1251
    %1507 = vmatprep.subr.bf16.mxu0 %v1256
    %1508 = vmatpush1.bf16.msra.mxu0 %v1255
    %1509 = vmatprep.subr.bf16.mxu0 %v1260
    %1510 = vmatpush1.bf16.msra.mxu0 %v1259
    %1511 = vmatprep.subr.bf16.mxu0 %v1264
    %1512 = vmatpush1.bf16.msra.mxu0 %v1263
    %1513 = vmatprep.subr.bf16.mxu0 %v1268
    %1514 = vmatpush1.bf16.msra.mxu0 %v1267
    %1515 = vmatprep.subr.bf16.mxu0 %v1272
    %1516 = vmatpush1.bf16.msra.mxu0 %v1271
    %1517 = vmatprep.subr.bf16.mxu0 %v1276
    %1518 = vmatpush1.bf16.msra.mxu0 %v1275
    %1519 = vmatprep.subr.bf16.mxu0 %v1280
    %1520 = vmatpush1.bf16.msra.mxu0 %v1279
    %1521 = vmatprep.subr.bf16.mxu0 %v1284
    %1522 = vmatpush1.bf16.msra.mxu0 %v1283
    %1523 = vmatprep.subr.bf16.mxu0 %v1288
    %1524 = vmatpush1.bf16.msra.mxu0 %v1287
    %1525 = vmatprep.subr.bf16.mxu0 %v1292
    %1526 = vmatpush1.bf16.msra.mxu0 %v1291
    %1527 = vmatprep.subr.bf16.mxu0 %v1296
    %1528 = vmatpush1.bf16.msra.mxu0 %v1295
    %1529 = vmatprep.subr.bf16.mxu0 %v1300
    %1530 = vmatpush1.bf16.msra.mxu0 %v1299
    %1531 = vmatprep.subr.bf16.mxu0 %v1304
    %1532 = vmatpush1.bf16.msra.mxu0 %v1303
    %1533 = vmatprep.subr.bf16.mxu0 %v1308
    %1534 = vmatpush1.bf16.msra.mxu0 %v1307
    %1535 = vmatprep.mubr.bf16.mxu0 %v710
    %1536 = vmatmul.mubr.bf16.gmra.mrb[0].mxu0 %v709
    %v1537 = vpop.f32.mrb[0].mxu0
    %v1538 = vadd.f32 %v846, %v1537
    %v1539 = vpop.f32.mrb[0].mxu0
    %v1540 = vadd.f32 %v850, %v1539
    %v1541 = vpop.f32.mrb[0].mxu0
    %v1542 = vadd.f32 %v846, %v1541
    %v1543 = vpop.f32.mrb[0].mxu0
    %v1544 = vadd.f32 %v850, %v1543
    %1545 = vdwg.mxu0
    %1546 = vmatprep.subr.bf16.mxu0 %v1312
    %1547 = vmatpush1.bf16.msra.mxu0 %v1311
    %1548 = vmatprep.subr.bf16.mxu0 %v1316
    %1549 = vmatpush1.bf16.msra.mxu0 %v1315
    %1550 = vmatprep.subr.bf16.mxu0 %v1320
    %1551 = vmatpush1.bf16.msra.mxu0 %v1319
    %1552 = vmatprep.subr.bf16.mxu0 %v1324
    %1553 = vmatpush1.bf16.msra.mxu0 %v1323
    %1554 = vmatprep.subr.bf16.mxu0 %v1328
    %1555 = vmatpush1.bf16.msra.mxu0 %v1327
    %1556 = vmatprep.subr.bf16.mxu0 %v1332
    %1557 = vmatpush1.bf16.msra.mxu0 %v1331
    %1558 = vmatprep.subr.bf16.mxu0 %v1336
    %1559 = vmatpush1.bf16.msra.mxu0 %v1335
    %1560 = vmatprep.subr.bf16.mxu0 %v1340
    %1561 = vmatpush1.bf16.msra.mxu0 %v1339
    %1562 = vmatprep.subr.bf16.mxu0 %v1344
    %1563 = vmatpush1.bf16.msra.mxu0 %v1343
    %1564 = vmatprep.subr.bf16.mxu0 %v1348
    %1565 = vmatpush1.bf16.msra.mxu0 %v1347
    %1566 = vmatprep.subr.bf16.mxu0 %v1352
    %1567 = vmatpush1.bf16.msra.mxu0 %v1351
    %1568 = vmatprep.subr.bf16.mxu0 %v1356
    %1569 = vmatpush1.bf16.msra.mxu0 %v1355
    %1570 = vmatprep.subr.bf16.mxu0 %v1360
    %1571 = vmatpush1.bf16.msra.mxu0 %v1359
    %1572 = vmatprep.subr.bf16.mxu0 %v1364
    %1573 = vmatpush1.bf16.msra.mxu0 %v1363
    %1574 = vmatprep.subr.bf16.mxu0 %v1368
    %1575 = vmatpush1.bf16.msra.mxu0 %v1367
    %1576 = vmatprep.subr.bf16.mxu0 %v1372
    %1577 = vmatpush1.bf16.msra.mxu0 %v1371
    %1578 = vmatprep.mubr.bf16.mxu0 %v712
    %1579 = vmatmul.mubr.bf16.gmra.mrb[0].mxu0 %v711
    %v1580 = vpop.f32.mrb[0].mxu0
    %v1581 = vadd.f32 %v1538, %v1580
    %v1582 = vpop.f32.mrb[0].mxu0
    %v1583 = vadd.f32 %v1540, %v1582
    %v1584 = vpop.f32.mrb[0].mxu0
    %v1585 = vadd.f32 %v1542, %v1584
    %v1586 = vpop.f32.mrb[0].mxu0
    %v1587 = vadd.f32 %v1544, %v1586
    %1588 = vdwg.mxu0
    %1589 = vmatprep.subr.bf16.mxu0 %v1250
    %1590 = vmatpush1.bf16.msra.mxu0 %v1249
    %1591 = vmatprep.subr.bf16.mxu0 %v1254
    %1592 = vmatpush1.bf16.msra.mxu0 %v1253
    %1593 = vmatprep.subr.bf16.mxu0 %v1258
    %1594 = vmatpush1.bf16.msra.mxu0 %v1257
    %1595 = vmatprep.subr.bf16.mxu0 %v1262
    %1596 = vmatpush1.bf16.msra.mxu0 %v1261
    %1597 = vmatprep.subr.bf16.mxu0 %v1266
    %1598 = vmatpush1.bf16.msra.mxu0 %v1265
    %1599 = vmatprep.subr.bf16.mxu0 %v1270
    %1600 = vmatpush1.bf16.msra.mxu0 %v1269
    %1601 = vmatprep.subr.bf16.mxu0 %v1274
    %1602 = vmatpush1.bf16.msra.mxu0 %v1273
    %1603 = vmatprep.subr.bf16.mxu0 %v1278
    %1604 = vmatpush1.bf16.msra.mxu0 %v1277
    %1605 = vmatprep.subr.bf16.mxu0 %v1282
    %1606 = vmatpush1.bf16.msra.mxu0 %v1281
    %1607 = vmatprep.subr.bf16.mxu0 %v1286
    %1608 = vmatpush1.bf16.msra.mxu0 %v1285
    %1609 = vmatprep.subr.bf16.mxu0 %v1290
    %1610 = vmatpush1.bf16.msra.mxu0 %v1289
    %1611 = vmatprep.subr.bf16.mxu0 %v1294
    %1612 = vmatpush1.bf16.msra.mxu0 %v1293
    %1613 = vmatprep.subr.bf16.mxu0 %v1298
    %1614 = vmatpush1.bf16.msra.mxu0 %v1297
    %1615 = vmatprep.subr.bf16.mxu0 %v1302
    %1616 = vmatpush1.bf16.msra.mxu0 %v1301
    %1617 = vmatprep.subr.bf16.mxu0 %v1306
    %1618 = vmatpush1.bf16.msra.mxu0 %v1305
    %1619 = vmatprep.subr.bf16.mxu0 %v1310
    %1620 = vmatpush1.bf16.msra.mxu0 %v1309
    %1621 = vmatprep.mubr.bf16.mxu0 %v710
    %1622 = vmatmul.mubr.bf16.gmra.mrb[0].mxu0 %v709
    %v1623 = vpop.f32.mrb[0].mxu0
    %v1624 = vadd.f32 %v854, %v1623
    %v1625 = vpop.f32.mrb[0].mxu0
    %v1626 = vadd.f32 %v858, %v1625
    %v1627 = vpop.f32.mrb[0].mxu0
    %v1628 = vadd.f32 %v854, %v1627
    %v1629 = vpop.f32.mrb[0].mxu0
    %v1630 = vadd.f32 %v858, %v1629
    %1631 = vdwg.mxu0
    %1632 = vmatprep.subr.bf16.mxu0 %v1314
    %1633 = vmatpush1.bf16.msra.mxu0 %v1313
    %1634 = vmatprep.subr.bf16.mxu0 %v1318
    %1635 = vmatpush1.bf16.msra.mxu0 %v1317
    %1636 = vmatprep.subr.bf16.mxu0 %v1322
    %1637 = vmatpush1.bf16.msra.mxu0 %v1321
    %1638 = vmatprep.subr.bf16.mxu0 %v1326
    %1639 = vmatpush1.bf16.msra.mxu0 %v1325
    %1640 = vmatprep.subr.bf16.mxu0 %v1330
    %1641 = vmatpush1.bf16.msra.mxu0 %v1329
    %1642 = vmatprep.subr.bf16.mxu0 %v1334
    %1643 = vmatpush1.bf16.msra.mxu0 %v1333
    %1644 = vmatprep.subr.bf16.mxu0 %v1338
    %1645 = vmatpush1.bf16.msra.mxu0 %v1337
    %1646 = vmatprep.subr.bf16.mxu0 %v1342
    %1647 = vmatpush1.bf16.msra.mxu0 %v1341
    %1648 = vmatprep.subr.bf16.mxu0 %v1346
    %1649 = vmatpush1.bf16.msra.mxu0 %v1345
    %1650 = vmatprep.subr.bf16.mxu0 %v1350
    %1651 = vmatpush1.bf16.msra.mxu0 %v1349
    %1652 = vmatprep.subr.bf16.mxu0 %v1354
    %1653 = vmatpush1.bf16.msra.mxu0 %v1353
    %1654 = vmatprep.subr.bf16.mxu0 %v1358
    %1655 = vmatpush1.bf16.msra.mxu0 %v1357
    %1656 = vmatprep.subr.bf16.mxu0 %v1362
    %1657 = vmatpush1.bf16.msra.mxu0 %v1361
    %1658 = vmatprep.subr.bf16.mxu0 %v1366
    %1659 = vmatpush1.bf16.msra.mxu0 %v1365
    %1660 = vmatprep.subr.bf16.mxu0 %v1370
    %1661 = vmatpush1.bf16.msra.mxu0 %v1369
    %1662 = vmatprep.subr.bf16.mxu0 %v1374
    %1663 = vmatpush1.bf16.msra.mxu0 %v1373
    %1664 = vmatprep.mubr.bf16.mxu0 %v712
    %1665 = vmatmul.mubr.bf16.gmra.mrb[0].mxu0 %v711
    %v1666 = vpop.f32.mrb[0].mxu0
    %v1667 = vadd.f32 %v1624, %v1666
    %v1668 = vpop.f32.mrb[0].mxu0
    %v1669 = vadd.f32 %v1626, %v1668
    %v1670 = vpop.f32.mrb[0].mxu0
    %v1671 = vadd.f32 %v1628, %v1670
    %v1672 = vpop.f32.mrb[0].mxu0
    %v1673 = vadd.f32 %v1630, %v1672
    %1674 = vdwg.mxu0
    %v1675 = vmax.f32 %v1581, 0.0
    %v1676 = vmax.f32 %v1583, 0.0
    %v1677 = vmax.f32 %v1667, 0.0
    %v1678 = vmax.f32 %v1669, 0.0
    %v1679 = vmax.f32 %v1585, 0.0
    %v1680 = vmax.f32 %v1587, 0.0
    %v1681 = vmax.f32 %v1671, 0.0
    %v1682 = vmax.f32 %v1673, 0.0
    %v1683 = vpack.c.bf16 %v1679, %v1675
    %v1684 = vpack.c.bf16 %v1680, %v1676
    %v1685 = vpack.c.bf16 %v1681, %v1677
    %v1686 = vpack.c.bf16 %v1682, %v1678
    %v1687 = vld [vmem:[#allocation10] sm:$0xf]
    %v1688 = vld [vmem:[#allocation10 + $0x4] sm:$0xf]
    %v1689 = vld [vmem:[#allocation10 + $0x8] sm:$0xf]
    %v1690 = vld [vmem:[#allocation10 + $0xc] sm:$0xf]
    %v1691 = vld [vmem:[#allocation10 + $0x10] sm:$0xf]
    %v1692 = vld [vmem:[#allocation10 + $0x14] sm:$0xf]
    %v1693 = vld [vmem:[#allocation10 + $0x18] sm:$0xf]
    %v1694 = vld [vmem:[#allocation10 + $0x1c] sm:$0xf]
    %v1695 = vld [vmem:[#allocation10 + $0x20] sm:$0xf]
    %v1696 = vld [vmem:[#allocation10 + $0x24] sm:$0xf]
    %v1697 = vld [vmem:[#allocation10 + $0x28] sm:$0xf]
    %v1698 = vld [vmem:[#allocation10 + $0x2c] sm:$0xf]
    %v1699 = vld [vmem:[#allocation10 + $0x30] sm:$0xf]
    %v1700 = vld [vmem:[#allocation10 + $0x34] sm:$0xf]
    %v1701 = vld [vmem:[#allocation10 + $0x38] sm:$0xf]
    %v1702 = vld [vmem:[#allocation10 + $0x3c] sm:$0xf]
    %v1703 = vld [vmem:[#allocation10 + $0x40] sm:$0xf]
    %v1704 = vld [vmem:[#allocation10 + $0x44] sm:$0xf]
    %v1705 = vld [vmem:[#allocation10 + $0x48] sm:$0xf]
    %v1706 = vld [vmem:[#allocation10 + $0x4c] sm:$0xf]
    %v1707 = vld [vmem:[#allocation10 + $0x50] sm:$0xf]
    %v1708 = vld [vmem:[#allocation10 + $0x54] sm:$0xf]
    %v1709 = vld [vmem:[#allocation10 + $0x58] sm:$0xf]
    %v1710 = vld [vmem:[#allocation10 + $0x5c] sm:$0xf]
    %v1711 = vld [vmem:[#allocation10 + $0x60] sm:$0xf]
    %v1712 = vld [vmem:[#allocation10 + $0x64] sm:$0xf]
    %v1713 = vld [vmem:[#allocation10 + $0x68] sm:$0xf]
    %v1714 = vld [vmem:[#allocation10 + $0x6c] sm:$0xf]
    %v1715 = vld [vmem:[#allocation10 + $0x70] sm:$0xf]
    %v1716 = vld [vmem:[#allocation10 + $0x74] sm:$0xf]
    %v1717 = vld [vmem:[#allocation10 + $0x78] sm:$0xf]
    %v1718 = vld [vmem:[#allocation10 + $0x7c] sm:$0xf]
    %v1719 = vld [vmem:[#allocation10 + $0x80] sm:$0xf]
    %v1720 = vld [vmem:[#allocation10 + $0x84] sm:$0xf]
    %v1721 = vld [vmem:[#allocation10 + $0x88] sm:$0xf]
    %v1722 = vld [vmem:[#allocation10 + $0x8c] sm:$0xf]
    %v1723 = vld [vmem:[#allocation10 + $0x90] sm:$0xf]
    %v1724 = vld [vmem:[#allocation10 + $0x94] sm:$0xf]
    %v1725 = vld [vmem:[#allocation10 + $0x98] sm:$0xf]
    %v1726 = vld [vmem:[#allocation10 + $0x9c] sm:$0xf]
    %v1727 = vld [vmem:[#allocation10 + $0xa0] sm:$0xf]
    %v1728 = vld [vmem:[#allocation10 + $0xa4] sm:$0xf]
    %v1729 = vld [vmem:[#allocation10 + $0xa8] sm:$0xf]
    %v1730 = vld [vmem:[#allocation10 + $0xac] sm:$0xf]
    %v1731 = vld [vmem:[#allocation10 + $0xb0] sm:$0xf]
    %v1732 = vld [vmem:[#allocation10 + $0xb4] sm:$0xf]
    %v1733 = vld [vmem:[#allocation10 + $0xb8] sm:$0xf]
    %v1734 = vld [vmem:[#allocation10 + $0xbc] sm:$0xf]
    %v1735 = vld [vmem:[#allocation10 + $0xc0] sm:$0xf]
    %v1736 = vld [vmem:[#allocation10 + $0xc4] sm:$0xf]
    %v1737 = vld [vmem:[#allocation10 + $0xc8] sm:$0xf]
    %v1738 = vld [vmem:[#allocation10 + $0xcc] sm:$0xf]
    %v1739 = vld [vmem:[#allocation10 + $0xd0] sm:$0xf]
    %v1740 = vld [vmem:[#allocation10 + $0xd4] sm:$0xf]
    %v1741 = vld [vmem:[#allocation10 + $0xd8] sm:$0xf]
    %v1742 = vld [vmem:[#allocation10 + $0xdc] sm:$0xf]
    %v1743 = vld [vmem:[#allocation10 + $0xe0] sm:$0xf]
    %v1744 = vld [vmem:[#allocation10 + $0xe4] sm:$0xf]
    %v1745 = vld [vmem:[#allocation10 + $0xe8] sm:$0xf]
    %v1746 = vld [vmem:[#allocation10 + $0xec] sm:$0xf]
    %v1747 = vld [vmem:[#allocation10 + $0xf0] sm:$0xf]
    %v1748 = vld [vmem:[#allocation10 + $0xf4] sm:$0xf]
    %v1749 = vld [vmem:[#allocation10 + $0xf8] sm:$0xf]
    %v1750 = vld [vmem:[#allocation10 + $0xfc] sm:$0xf]
    %v1751 = vld [vmem:[%s8] sm:$0x1]
    %v1753 = vlaneseq
    %v1754 = vshrl.u32 %v1753, 7
    %v1755 = vsub.s32 0, %v1754
    %v1756 = vrot.slane %v1751, %v1755
    %v1822 = vunpack.c.l.b16 %v1687
    %v1823 = vunpack.c.l.b16 %v1688
    %v1824 = vunpack.c.l.b16 %v1689
    %v1825 = vunpack.c.l.b16 %v1690
    %v1826 = vunpack.c.l.b16 %v1691
    %v1827 = vunpack.c.l.b16 %v1692
    %v1828 = vunpack.c.l.b16 %v1693
    %v1829 = vunpack.c.l.b16 %v1694
    %v1830 = vunpack.c.l.b16 %v1695
    %v1831 = vunpack.c.l.b16 %v1696
    %v1832 = vunpack.c.l.b16 %v1697
    %v1833 = vunpack.c.l.b16 %v1698
    %v1834 = vunpack.c.l.b16 %v1699
    %v1835 = vunpack.c.l.b16 %v1700
    %v1836 = vunpack.c.l.b16 %v1701
    %v1837 = vunpack.c.l.b16 %v1702
    %v1838 = vunpack.c.l.b16 %v1703
    %v1839 = vunpack.c.l.b16 %v1704
    %v1840 = vunpack.c.l.b16 %v1705
    %v1841 = vunpack.c.l.b16 %v1706
    %v1842 = vunpack.c.l.b16 %v1707
    %v1843 = vunpack.c.l.b16 %v1708
    %v1844 = vunpack.c.l.b16 %v1709
    %v1845 = vunpack.c.l.b16 %v1710
    %v1846 = vunpack.c.l.b16 %v1711
    %v1847 = vunpack.c.l.b16 %v1712
    %v1848 = vunpack.c.l.b16 %v1713
    %v1849 = vunpack.c.l.b16 %v1714
    %v1850 = vunpack.c.l.b16 %v1715
    %v1851 = vunpack.c.l.b16 %v1716
    %v1852 = vunpack.c.l.b16 %v1717
    %v1853 = vunpack.c.l.b16 %v1718
    %v1854 = vunpack.c.l.b16 %v1719
    %v1855 = vunpack.c.l.b16 %v1720
    %v1856 = vunpack.c.l.b16 %v1721
    %v1857 = vunpack.c.l.b16 %v1722
    %v1858 = vunpack.c.l.b16 %v1723
    %v1859 = vunpack.c.l.b16 %v1724
    %v1860 = vunpack.c.l.b16 %v1725
    %v1861 = vunpack.c.l.b16 %v1726
    %v1862 = vunpack.c.l.b16 %v1727
    %v1863 = vunpack.c.l.b16 %v1728
    %v1864 = vunpack.c.l.b16 %v1729
    %v1865 = vunpack.c.l.b16 %v1730
    %v1866 = vunpack.c.l.b16 %v1731
    %v1867 = vunpack.c.l.b16 %v1732
    %v1868 = vunpack.c.l.b16 %v1733
    %v1869 = vunpack.c.l.b16 %v1734
    %v1870 = vunpack.c.l.b16 %v1735
    %v1871 = vunpack.c.l.b16 %v1736
    %v1872 = vunpack.c.l.b16 %v1737
    %v1873 = vunpack.c.l.b16 %v1738
    %v1874 = vunpack.c.l.b16 %v1739
    %v1875 = vunpack.c.l.b16 %v1740
    %v1876 = vunpack.c.l.b16 %v1741
    %v1877 = vunpack.c.l.b16 %v1742
    %v1878 = vunpack.c.l.b16 %v1743
    %v1879 = vunpack.c.l.b16 %v1744
    %v1880 = vunpack.c.l.b16 %v1745
    %v1881 = vunpack.c.l.b16 %v1746
    %v1882 = vunpack.c.l.b16 %v1747
    %v1883 = vunpack.c.l.b16 %v1748
    %v1884 = vunpack.c.l.b16 %v1749
    %v1885 = vunpack.c.l.b16 %v1750
    %v1886 = vpack.c.b16 %v1823, %v1822
    %v1887 = vpack.c.b16 %v1825, %v1824
    %v1888 = vpack.c.b16 %v1827, %v1826
    %v1889 = vpack.c.b16 %v1829, %v1828
    %v1890 = vpack.c.b16 %v1831, %v1830
    %v1891 = vpack.c.b16 %v1833, %v1832
    %v1892 = vpack.c.b16 %v1835, %v1834
    %v1893 = vpack.c.b16 %v1837, %v1836
    %v1894 = vpack.c.b16 %v1839, %v1838
    %v1895 = vpack.c.b16 %v1841, %v1840
    %v1896 = vpack.c.b16 %v1843, %v1842
    %v1897 = vpack.c.b16 %v1845, %v1844
    %v1898 = vpack.c.b16 %v1847, %v1846
    %v1899 = vpack.c.b16 %v1849, %v1848
    %v1900 = vpack.c.b16 %v1851, %v1850
    %v1901 = vpack.c.b16 %v1853, %v1852
    %v1902 = vpack.c.b16 %v1855, %v1854
    %v1903 = vpack.c.b16 %v1857, %v1856
    %v1904 = vpack.c.b16 %v1859, %v1858
    %v1905 = vpack.c.b16 %v1861, %v1860
    %v1906 = vpack.c.b16 %v1863, %v1862
    %v1907 = vpack.c.b16 %v1865, %v1864
    %v1908 = vpack.c.b16 %v1867, %v1866
    %v1909 = vpack.c.b16 %v1869, %v1868
    %v1910 = vpack.c.b16 %v1871, %v1870
    %v1911 = vpack.c.b16 %v1873, %v1872
    %v1912 = vpack.c.b16 %v1875, %v1874
    %v1913 = vpack.c.b16 %v1877, %v1876
    %v1914 = vpack.c.b16 %v1879, %v1878
    %v1915 = vpack.c.b16 %v1881, %v1880
    %v1916 = vpack.c.b16 %v1883, %v1882
    %v1917 = vpack.c.b16 %v1885, %v1884
    %1950 = vmatprep.subr.bf16.mxu0 0
    %1951 = vmatpush1.bf16.msra.mxu0 %v1886
    %1952 = vmatprep.subr.bf16.mxu0 0
    %1953 = vmatpush1.bf16.msra.mxu0 %v1887
    %1954 = vmatprep.subr.bf16.mxu0 0
    %1955 = vmatpush1.bf16.msra.mxu0 %v1888
    %1956 = vmatprep.subr.bf16.mxu0 0
    %1957 = vmatpush1.bf16.msra.mxu0 %v1889
    %1958 = vmatprep.subr.bf16.mxu0 0
    %1959 = vmatpush1.bf16.msra.mxu0 %v1890
    %1960 = vmatprep.subr.bf16.mxu0 0
    %1961 = vmatpush1.bf16.msra.mxu0 %v1891
    %1962 = vmatprep.subr.bf16.mxu0 0
    %1963 = vmatpush1.bf16.msra.mxu0 %v1892
    %1964 = vmatprep.subr.bf16.mxu0 0
    %1965 = vmatpush1.bf16.msra.mxu0 %v1893
    %1966 = vmatprep.subr.bf16.mxu0 0
    %1967 = vmatpush1.bf16.msra.mxu0 %v1894
    %1968 = vmatprep.subr.bf16.mxu0 0
    %1969 = vmatpush1.bf16.msra.mxu0 %v1895
    %1970 = vmatprep.subr.bf16.mxu0 0
    %1971 = vmatpush1.bf16.msra.mxu0 %v1896
    %1972 = vmatprep.subr.bf16.mxu0 0
    %1973 = vmatpush1.bf16.msra.mxu0 %v1897
    %1974 = vmatprep.subr.bf16.mxu0 0
    %1975 = vmatpush1.bf16.msra.mxu0 %v1898
    %1976 = vmatprep.subr.bf16.mxu0 0
    %1977 = vmatpush1.bf16.msra.mxu0 %v1899
    %1978 = vmatprep.subr.bf16.mxu0 0
    %1979 = vmatpush1.bf16.msra.mxu0 %v1900
    %1980 = vmatprep.subr.bf16.mxu0 0
    %1981 = vmatpush1.bf16.msra.mxu0 %v1901
    %1982 = vmatprep.mubr.bf16.mxu0 %v1684
    %1983 = vmatmul.mubr.bf16.gmra.mrb[0].mxu0 %v1683
    %v1984 = vpop.f32.mrb[0].mxu0
    %v1985 = vadd.f32 %v1756, %v1984
    %v1986 = vpop.f32.mrb[0].mxu0
    %v1987 = vpop.f32.mrb[0].mxu0
    %v1988 = vadd.f32 %v1756, %v1987
    %v1989 = vpop.f32.mrb[0].mxu0
    %1990 = vdwg.mxu0
    %1991 = vmatprep.subr.bf16.mxu0 0
    %1992 = vmatpush1.bf16.msra.mxu0 %v1902
    %1993 = vmatprep.subr.bf16.mxu0 0
    %1994 = vmatpush1.bf16.msra.mxu0 %v1903
    %1995 = vmatprep.subr.bf16.mxu0 0
    %1996 = vmatpush1.bf16.msra.mxu0 %v1904
    %1997 = vmatprep.subr.bf16.mxu0 0
    %1998 = vmatpush1.bf16.msra.mxu0 %v1905
    %1999 = vmatprep.subr.bf16.mxu0 0
    %2000 = vmatpush1.bf16.msra.mxu0 %v1906
    %2001 = vmatprep.subr.bf16.mxu0 0
    %2002 = vmatpush1.bf16.msra.mxu0 %v1907
    %2003 = vmatprep.subr.bf16.mxu0 0
    %2004 = vmatpush1.bf16.msra.mxu0 %v1908
    %2005 = vmatprep.subr.bf16.mxu0 0
    %2006 = vmatpush1.bf16.msra.mxu0 %v1909
    %2007 = vmatprep.subr.bf16.mxu0 0
    %2008 = vmatpush1.bf16.msra.mxu0 %v1910
    %2009 = vmatprep.subr.bf16.mxu0 0
    %2010 = vmatpush1.bf16.msra.mxu0 %v1911
    %2011 = vmatprep.subr.bf16.mxu0 0
    %2012 = vmatpush1.bf16.msra.mxu0 %v1912
    %2013 = vmatprep.subr.bf16.mxu0 0
    %2014 = vmatpush1.bf16.msra.mxu0 %v1913
    %2015 = vmatprep.subr.bf16.mxu0 0
    %2016 = vmatpush1.bf16.msra.mxu0 %v1914
    %2017 = vmatprep.subr.bf16.mxu0 0
    %2018 = vmatpush1.bf16.msra.mxu0 %v1915
    %2019 = vmatprep.subr.bf16.mxu0 0
    %2020 = vmatpush1.bf16.msra.mxu0 %v1916
    %2021 = vmatprep.subr.bf16.mxu0 0
    %2022 = vmatpush1.bf16.msra.mxu0 %v1917
    %2023 = vmatprep.mubr.bf16.mxu0 %v1686
    %2024 = vmatmul.mubr.bf16.gmra.mrb[0].mxu0 %v1685
    %v2025 = vpop.f32.mrb[0].mxu0
    %v2026 = vadd.f32 %v1985, %v2025
    %v2027 = vpop.f32.mrb[0].mxu0
    %v2028 = vpop.f32.mrb[0].mxu0
    %v2029 = vadd.f32 %v1988, %v2028
    %v2030 = vpop.f32.mrb[0].mxu0
    %2031 = vdwg.mxu0
    %2032 = vmax.xlane.f32.xlu0 %v2026
    %v2033 = vpop.xlane.xlu0 %2032
    %2034 = vmax.xlane.f32.xlu0 %v2029
    %v2035 = vpop.xlane.xlu0 %2034
    %v2036 = vsub.f32 %v2026, %v2033
    %v2037 = vsub.f32 %v2029, %v2035
    %v2038 = vmul.f32 %v2036, 1.442695
    %v2039 = vpow.pop %v2038
    %v2040 = vmul.f32 %v2037, 1.442695
    %v2041 = vpow.pop %v2040
    %2042 = vadd.xlane.f32.xlu0 %v2039
    %v2043 = vpop.xlane.xlu0 %2042
    %2044 = vadd.xlane.f32.xlu0 %v2041
    %v2045 = vpop.xlane.xlu0 %2044
    %v2046 = vrcp.pop %v2043
    %v2047 = vmul.f32 1.0, %v2046
    %v2048 = vrcp.pop %v2045
    %v2049 = vmul.f32 1.0, %v2048
    %v2050 = vmul.f32 %v2039, %v2047
    %v2051 = vmul.f32 %v2041, %v2049
    %2052 = vst [vmem:[#allocation11] sm:$0xff] %v2050
    %2053 = vst [vmem:[#allocation11 + $0x8] sm:$0xff] %v2051
    // Predicated region
    $region58: #{tpu_custom_call.1} parent=1 // pred_check
      _
    $region59: #{tpu_custom_call.1} parent=1 // pred_check_branch
      %2055 = sbr.rel (0) target = $region61
    $region60: #{tpu_custom_call.1} parent=1 // pred_region
      %s2057 = ssub.s32 256, 256
      %2058 = vsyncadd [#allocation4], %s2057
      %s2059 = sshll.u32 [#allocation11], 4
      %s2060 = int_to_ptr.vmem [resolvable:$true] %s2059
      %2065 = dma.vmem_to_hbm [thread:$0]  %s2060, 256, %s9, [#allocation4], 128, 128, 8
    $region61: #{tpu_custom_call.1} parent=1 // pred_fallthru
      _
    // Predicated region
    $region62: #{tpu_custom_call.1} parent=1 // pred_check
      _
    $region63: #{tpu_custom_call.1} parent=1 // pred_check_branch
      %2067 = sbr.rel (0) target = $region65
    $region64: #{tpu_custom_call.1} parent=1 // pred_region
      %2068 = dma.done [#allocation4], 256
    $region65: #{tpu_custom_call.1} parent=1 // pred_fallthru
      _
    %2069 = vsyncpa [#allocation3], 1
    %2070 = vsyncpa [#allocation6], 1
    %2071 = vsyncpa [#allocation9], 1
    %2072 = vsyncpa [#allocation4], 1

</llo_original>
